<compile_context>
chip_gen: v6e
topology: v6e:2x2x1
jax: 0.10.0
libtpu: 0.0.40
codegen_flags: <defaults>
</compile_context>

<pallas_src>
import functools

import jax
import jax.numpy as jnp
from jax import lax
from jax.experimental import pallas as pl
from jax.experimental.pallas import tpu as pltpu


# ----------------------------------------------------------------------------
# Stage 1: fused 1x1 conv + folded BN + ReLU projections (a, t, r2).
# ----------------------------------------------------------------------------
def _proj_kernel(x1c_ref, x2c_ref, x3c_ref,
                 w1_ref, b1_ref, w2_ref, b2_ref, w3_ref, b3_ref,
                 a_ref, t_ref, r2_ref):
    # x*_ref blocks: (1, C, TP)  (channels-first, flattened spatial tile)
    # w*_ref: (C, Cout), b*_ref: (1, Cout)
    dn = (((0,), (0,)), ((), ()))  # contract channel axis of x with axis 0 of w

    def proj(x, w_ref, b_ref):
        y = lax.dot_general(x, w_ref[...], dn, preferred_element_type=jnp.float32)
        return jnp.maximum(y + b_ref[...], 0.0)          # (TP, Cout), ReLU

    a_ref[0] = proj(x1c_ref[0], w1_ref, b1_ref).astype(a_ref.dtype)
    t_ref[0] = proj(x2c_ref[0], w2_ref, b2_ref).astype(t_ref.dtype)
    r2_ref[0] = proj(x3c_ref[0], w3_ref, b3_ref).astype(r2_ref.dtype)


# ----------------------------------------------------------------------------
# Stage 2: flash-style attention with online softmax + gam * out + x1 residual.
# Everything is kept channels-first: acc is (C, TQ), output is (B, C, HW).
# ----------------------------------------------------------------------------
def _flash_kernel(a_ref, t_ref, r2_ref, x1_ref, gam_ref, out_ref,
                  m_sc, l_sc, acc_sc):
    ki = pl.program_id(2)

    @pl.when(ki == 0)
    def _init():
        m_sc[...] = jnp.full(m_sc.shape, -jnp.inf, m_sc.dtype)
        l_sc[...] = jnp.zeros(l_sc.shape, l_sc.dtype)
        acc_sc[...] = jnp.zeros(acc_sc.shape, acc_sc.dtype)

    # score tile s (TK, TQ) = t_tile @ a_tile^T : bf16 operands, f32 accumulate,
    # written as a contraction on the last dims (no explicit .T / XLU transpose).
    s = lax.dot_general(t_ref[0], a_ref[0], (((1,), (1,)), ((), ())),
                        preferred_element_type=jnp.float32)

    m_prev = m_sc[...]                                     # (1, TQ)
    m_new = jnp.maximum(m_prev, jnp.max(s, axis=0, keepdims=True))
    alpha = jnp.exp(m_prev - m_new)                        # (1, TQ)
    p = jnp.exp(s - m_new)                                 # (TK, TQ)
    l_sc[...] = alpha * l_sc[...] + jnp.sum(p, axis=0, keepdims=True)
    # acc (C, TQ) += r2_tile^T @ p  (contract the TK axis of both operands)
    acc_sc[...] = alpha * acc_sc[...] + lax.dot_general(
        r2_ref[0], p.astype(r2_ref.dtype), (((0,), (0,)), ((), ())),
        preferred_element_type=jnp.float32)
    m_sc[...] = m_new

    @pl.when(ki == pl.num_programs(2) - 1)
    def _finalize():
        inv_l = pl.reciprocal(l_sc[...], approx=True)      # EUP slot, nearly free
        gam = gam_ref[0]                                   # scalar from SMEM
        out_ref[0] = (gam * (acc_sc[...] * inv_l) + x1_ref[0]).astype(out_ref.dtype)


# ----------------------------------------------------------------------------
# Wrapper
# ----------------------------------------------------------------------------
def _pick_tile(hw, target, step):
    """Largest multiple of `step` <= target that divides hw; else full hw."""
    t = min(int(target), hw)
    t -= t % step
    while t >= step:
        if hw % t == 0:
            return t
        t -= step
    return hw


@functools.partial(jax.jit, static_argnames=("tq", "tk"))
def gfapm_forward(x1, x2, x3, params, *, tq=None, tk=None):
    """x1, x2, x3: NCHW float32 tensors of identical shape (B, C, H, W)."""
    B, C, H, W = x1.shape
    HW = H * W
    assert C % 4 == 0 and C >= 4
    C4 = C // 4
    w1, b1, w2, b2, w3, b3, gam = params

    # ---------------- Stage 1: projections ----------------
    # NCHW -> (B, C, HW) is a free reshape (no data movement / transpose).
    x1c = x1.reshape(B, C, HW)
    x2c = x2.reshape(B, C, HW)
    x3c = x3.reshape(B, C, HW)

    tp = _pick_tile(HW, 512, 128)          # spatial tile (multiple of 128 or full HW)
    n_p = HW // tp

    x_spec = pl.BlockSpec((1, C, tp), lambda b, p: (b, 0, p))

    def w_spec(co):
        return pl.BlockSpec((C, co), lambda b, p: (0, 0))

    def b_spec(co):
        return pl.BlockSpec((1, co), lambda b, p: (0, 0))

    def o_spec(co):
        return pl.BlockSpec((1, tp, co), lambda b, p: (b, p, 0))

    ws1 = (2 * (3 * C * tp * 4 + tp * (2 * C4 + C) * 2)
           + ((2 * C * C4 + C * C) + (2 * C4 + C)) * 4)

    a, t, r2 = pl.pallas_call(
        _proj_kernel,
        out_shape=(jax.ShapeDtypeStruct((B, HW, C4), jnp.bfloat16),
                   jax.ShapeDtypeStruct((B, HW, C4), jnp.bfloat16),
                   jax.ShapeDtypeStruct((B, HW, C), jnp.bfloat16)),
        grid_spec=pltpu.PrefetchScalarGridSpec(
            num_scalar_prefetch=0,
            grid=(B, n_p),
            in_specs=[x_spec, x_spec, x_spec,
                      w_spec(C4), b_spec(C4),
                      w_spec(C4), b_spec(C4),
                      w_spec(C), b_spec(C)],
            out_specs=[o_spec(C4), o_spec(C4), o_spec(C)],
        ),
        compiler_params=pltpu.CompilerParams(
            dimension_semantics=("parallel", "parallel"),
            vmem_limit_bytes=int(min(max(2 * ws1, 8 << 20), 32 << 20)),
        ),
    )(x1c, x2c, x3c, w1, b1, w2, b2, w3, b3)

    # ---------------- Stage 2: flash attention + residual (channels-first) ----
    # q-tile is the lane axis of the output block: multiple of 128 or full HW.
    tq = _pick_tile(HW, tq if tq else 512, 128)
    # kv-tile only needs sublane alignment (multiple of 8).
    tk = _pick_tile(HW, tk if tk else 512, 8)
    nq, nk = HW // tq, HW // tk

    ws2 = (2 * (tq * C4 * 2 + tk * C4 * 2 + tk * C * 2 + 2 * C * tq * 4)
           + C * tq * 4 + 2 * tq * 4 + tk * tq * 4)

    out = pl.pallas_call(
        _flash_kernel,
        out_shape=jax.ShapeDtypeStruct((B, C, HW), jnp.float32),
        grid_spec=pltpu.PrefetchScalarGridSpec(
            num_scalar_prefetch=0,
            grid=(B, nq, nk),
            in_specs=[
                pl.BlockSpec((1, tq, C4), lambda b, q, k: (b, q, 0)),   # a
                pl.BlockSpec((1, tk, C4), lambda b, q, k: (b, k, 0)),   # t
                pl.BlockSpec((1, tk, C), lambda b, q, k: (b, k, 0)),    # r2
                pl.BlockSpec((1, C, tq), lambda b, q, k: (b, 0, q)),    # x1 residual
                pl.BlockSpec(memory_space=pltpu.MemorySpace.SMEM),      # gam scalar
            ],
            out_specs=pl.BlockSpec((1, C, tq), lambda b, q, k: (b, 0, q)),
            scratch_shapes=[
                pltpu.VMEM((1, tq), jnp.float32),    # running max  (per q)
                pltpu.VMEM((1, tq), jnp.float32),    # running sum  (per q)
                pltpu.VMEM((C, tq), jnp.float32),    # output accumulator
            ],
        ),
        input_output_aliases={3: 0},   # reuse the x1c HBM buffer for the output
        compiler_params=pltpu.CompilerParams(
            dimension_semantics=("parallel", "parallel", "arbitrary"),
            vmem_limit_bytes=int(min(max(2 * ws2, 8 << 20), 32 << 20)),
        ),
    )(a, t, r2, x1c, gam)

    # (B, C, HW) -> NCHW is a free reshape.
    return out.reshape(B, C, H, W)


# ----------------------------------------------------------------------------
# Synthetic parameters (1x1 conv + BN folded) and a pure-JAX f32 reference.
# ----------------------------------------------------------------------------
def make_params(key, C):
    C4 = C // 4
    eps = 1e-5
    keys = jax.random.split(key, 12)

    def conv_bn(kw, kb, kg, kbeta, c_in, c_out):
        w = jax.random.normal(kw, (c_out, c_in), jnp.float32) * 0.1
        b = jax.random.normal(kb, (c_out,), jnp.float32) * 0.1
        gamma = 1.0 + 0.1 * jax.random.normal(kg, (c_out,), jnp.float32)
        beta = 0.1 * jax.random.normal(kbeta, (c_out,), jnp.float32)
        mean = 0.05 * jnp.arange(c_out, dtype=jnp.float32)
        var = 1.0 + 0.02 * jnp.arange(c_out, dtype=jnp.float32)
        scale = gamma / jnp.sqrt(var + eps)
        w_eff = (w * scale[:, None]).T          # (c_in, c_out)
        b_eff = ((b - mean) * scale + beta)[None, :]  # (1, c_out)
        return w_eff, b_eff

    w1, b1 = conv_bn(keys[0], keys[1], keys[2], keys[3], C, C4)
    w2, b2 = conv_bn(keys[4], keys[5], keys[6], keys[7], C, C4)
    w3, b3 = conv_bn(keys[8], keys[9], keys[10], keys[11], C, C)
    # torch init is gam=0 (output would trivially equal x1); use 0.5 to exercise it.
    gam = jnp.full((1,), 0.5, jnp.float32)
    return (w1, b1, w2, b2, w3, b3, gam)


def gfapm_reference(x1, x2, x3, params):
    """Pure-JAX f32 reference matching the torch forward."""
    w1, b1, w2, b2, w3, b3, gam = params
    B, C, H, W = x1.shape
    HW = H * W

    def cb(x, w, b):
        xf = jnp.transpose(x, (0, 2, 3, 1)).reshape(B, HW, C)
        return jax.nn.relu(jnp.einsum("bpc,co->bpo", xf, w) + b[None])

    a = cb(x1, w1, b1)                                       # (B, HW, C/4)
    t = cb(x2, w2, b2)                                       # (B, HW, C/4)
    att = jax.nn.softmax(jnp.einsum("bpc,bqc->bpq", a, t), axis=-1)
    r2 = cb(x3, w3, b3)                                      # (B, HW, C)
    x1f = jnp.transpose(x1, (0, 2, 3, 1)).reshape(B, HW, C)
    out = gam[0] * jnp.einsum("bpq,bqc->bpc", att, r2) + x1f
    return jnp.transpose(out.reshape(B, H, W, C), (0, 3, 1, 2))


if __name__ == "__main__":
    B, C, H, W = 2, 16, 8, 8          # HW = 64; tk=32 exercises the online-softmax loop
    key = jax.random.PRNGKey(0)
    k1, k2, k3, kp = jax.random.split(key, 4)
    x1 = jax.random.normal(k1, (B, C, H, W), jnp.float32)
    x2 = jax.random.normal(k2, (B, C, H, W), jnp.float32)
    x3 = jax.random.normal(k3, (B, C, H, W), jnp.float32)
    params = make_params(kp, C)

    out = gfapm_forward(x1, x2, x3, params, tk=32)
    jax.block_until_ready(out)

    ref = gfapm_reference(x1, x2, x3, params)
    assert out.shape == (B, C, H, W)
    err = float(jnp.max(jnp.abs(out - ref)))
    # bf16 MXU operands + approx reciprocal -> looser tolerance than pure f32.
    assert jnp.allclose(out, ref, atol=2e-2, rtol=2e-2), err
    print("KERNEL_OK")
</pallas_src>

<mosaic_0001>
module attributes {stable_mosaic.version = 11 : i64} {
  func.func @_proj_kernel(%arg0: i32, %arg1: i32, %arg2: memref<1x16x64xf32, #tpu.memory_space<vmem>>, %arg3: memref<1x16x64xf32, #tpu.memory_space<vmem>>, %arg4: memref<1x16x64xf32, #tpu.memory_space<vmem>>, %arg5: memref<16x4xf32, #tpu.memory_space<vmem>>, %arg6: memref<1x4xf32, #tpu.memory_space<vmem>>, %arg7: memref<16x4xf32, #tpu.memory_space<vmem>>, %arg8: memref<1x4xf32, #tpu.memory_space<vmem>>, %arg9: memref<16x16xf32, #tpu.memory_space<vmem>>, %arg10: memref<1x16xf32, #tpu.memory_space<vmem>>, %arg11: memref<1x64x4xbf16, #tpu.memory_space<vmem>>, %arg12: memref<1x64x4xbf16, #tpu.memory_space<vmem>>, %arg13: memref<1x64x16xbf16, #tpu.memory_space<vmem>>) attributes {dimension_semantics = [#tpu.dimension_semantics<parallel>, #tpu.dimension_semantics<parallel>], iteration_bounds = array<i64: 2, 1>, scalar_prefetch = 0 : i64, scratch_operands = 0 : i64, tpu.core_type = #tpu.core_type<tc>, window_params = [{transform_indices = @transform_0, window_bounds = array<i64: 1, 16, 64>}, {transform_indices = @transform_1, window_bounds = array<i64: 1, 16, 64>}, {transform_indices = @transform_2, window_bounds = array<i64: 1, 16, 64>}, {pipeline_mode = #tpu.pipeline_mode<synchronous>, transform_indices = @transform_3, window_bounds = array<i64: 16, 4>}, {pipeline_mode = #tpu.pipeline_mode<synchronous>, transform_indices = @transform_4, window_bounds = array<i64: 1, 4>}, {pipeline_mode = #tpu.pipeline_mode<synchronous>, transform_indices = @transform_5, window_bounds = array<i64: 16, 4>}, {pipeline_mode = #tpu.pipeline_mode<synchronous>, transform_indices = @transform_6, window_bounds = array<i64: 1, 4>}, {pipeline_mode = #tpu.pipeline_mode<synchronous>, transform_indices = @transform_7, window_bounds = array<i64: 16, 16>}, {pipeline_mode = #tpu.pipeline_mode<synchronous>, transform_indices = @transform_8, window_bounds = array<i64: 1, 16>}, {transform_indices = @transform_9, window_bounds = array<i64: 1, 64, 4>}, {transform_indices = @transform_10, window_bounds = array<i64: 1, 64, 4>}, {transform_indices = @transform_11, window_bounds = array<i64: 1, 64, 16>}]} {
    %c0 = arith.constant 0 : index
    %c0_0 = arith.constant 0 : index
    %c0_1 = arith.constant 0 : index
    %0 = vector.load %arg2[%c0, %c0_0, %c0_1] : memref<1x16x64xf32, #tpu.memory_space<vmem>>, vector<1x16x64xf32>
    %1 = vector.shape_cast %0 : vector<1x16x64xf32> to vector<16x64xf32>
    %c0_2 = arith.constant 0 : index
    %c0_3 = arith.constant 0 : index
    %2 = vector.load %arg5[%c0_2, %c0_3] : memref<16x4xf32, #tpu.memory_space<vmem>>, vector<16x4xf32>
    %cst = arith.constant dense<0.000000e+00> : vector<64x4xf32>
    %3 = tpu.matmul %1, %2, %cst {dimension_numbers = #tpu.dot_dimension_numbers<[0], [0], [1], [1], [0, 1, 1, 1], [], []>} : vector<16x64xf32>, vector<16x4xf32>, vector<64x4xf32> -> vector<64x4xf32>
    %c0_4 = arith.constant 0 : index
    %c0_5 = arith.constant 0 : index
    %4 = vector.load %arg6[%c0_4, %c0_5] : memref<1x4xf32, #tpu.memory_space<vmem>>, vector<1x4xf32>
    %5 = vector.broadcast %4 : vector<1x4xf32> to vector<64x4xf32>
    %6 = arith.addf %3, %5 : vector<64x4xf32>
    %cst_6 = arith.constant 0.000000e+00 : f32
    %7 = vector.broadcast %cst_6 : f32 to vector<64x4xf32>
    %8 = arith.maximumf %6, %7 : vector<64x4xf32>
    %9 = arith.truncf %8 : vector<64x4xf32> to vector<64x4xbf16>
    %c0_7 = arith.constant 0 : index
    %c0_8 = arith.constant 0 : index
    %c0_9 = arith.constant 0 : index
    %10 = vector.load %arg11[%c0_7, %c0_8, %c0_9] : memref<1x64x4xbf16, #tpu.memory_space<vmem>>, vector<1x64x4xbf16>
    %11 = vector.shape_cast %10 : vector<1x64x4xbf16> to vector<64x4xbf16>
    %12 = vector.shape_cast %9 : vector<64x4xbf16> to vector<1x64x4xbf16>
    tpu.vector_store %arg11[%c0_7, %c0_8, %c0_9], %12 {strides = array<i32>} : memref<1x64x4xbf16, #tpu.memory_space<vmem>>, vector<1x64x4xbf16>,
    %c0_10 = arith.constant 0 : index
    %c0_11 = arith.constant 0 : index
    %c0_12 = arith.constant 0 : index
    %13 = vector.load %arg3[%c0_10, %c0_11, %c0_12] : memref<1x16x64xf32, #tpu.memory_space<vmem>>, vector<1x16x64xf32>
    %14 = vector.shape_cast %13 : vector<1x16x64xf32> to vector<16x64xf32>
    %c0_13 = arith.constant 0 : index
    %c0_14 = arith.constant 0 : index
    %15 = vector.load %arg7[%c0_13, %c0_14] : memref<16x4xf32, #tpu.memory_space<vmem>>, vector<16x4xf32>
    %cst_15 = arith.constant dense<0.000000e+00> : vector<64x4xf32>
    %16 = tpu.matmul %14, %15, %cst_15 {dimension_numbers = #tpu.dot_dimension_numbers<[0], [0], [1], [1], [0, 1, 1, 1], [], []>} : vector<16x64xf32>, vector<16x4xf32>, vector<64x4xf32> -> vector<64x4xf32>
    %c0_16 = arith.constant 0 : index
    %c0_17 = arith.constant 0 : index
    %17 = vector.load %arg8[%c0_16, %c0_17] : memref<1x4xf32, #tpu.memory_space<vmem>>, vector<1x4xf32>
    %18 = vector.broadcast %17 : vector<1x4xf32> to vector<64x4xf32>
    %19 = arith.addf %16, %18 : vector<64x4xf32>
    %cst_18 = arith.constant 0.000000e+00 : f32
    %20 = vector.broadcast %cst_18 : f32 to vector<64x4xf32>
    %21 = arith.maximumf %19, %20 : vector<64x4xf32>
    %22 = arith.truncf %21 : vector<64x4xf32> to vector<64x4xbf16>
    %c0_19 = arith.constant 0 : index
    %c0_20 = arith.constant 0 : index
    %c0_21 = arith.constant 0 : index
    %23 = vector.load %arg12[%c0_19, %c0_20, %c0_21] : memref<1x64x4xbf16, #tpu.memory_space<vmem>>, vector<1x64x4xbf16>
    %24 = vector.shape_cast %23 : vector<1x64x4xbf16> to vector<64x4xbf16>
    %25 = vector.shape_cast %22 : vector<64x4xbf16> to vector<1x64x4xbf16>
    tpu.vector_store %arg12[%c0_19, %c0_20, %c0_21], %25 {strides = array<i32>} : memref<1x64x4xbf16, #tpu.memory_space<vmem>>, vector<1x64x4xbf16>,
    %c0_22 = arith.constant 0 : index
    %c0_23 = arith.constant 0 : index
    %c0_24 = arith.constant 0 : index
    %26 = vector.load %arg4[%c0_22, %c0_23, %c0_24] : memref<1x16x64xf32, #tpu.memory_space<vmem>>, vector<1x16x64xf32>
    %27 = vector.shape_cast %26 : vector<1x16x64xf32> to vector<16x64xf32>
    %c0_25 = arith.constant 0 : index
    %c0_26 = arith.constant 0 : index
    %28 = vector.load %arg9[%c0_25, %c0_26] : memref<16x16xf32, #tpu.memory_space<vmem>>, vector<16x16xf32>
    %cst_27 = arith.constant dense<0.000000e+00> : vector<64x16xf32>
    %29 = tpu.matmul %27, %28, %cst_27 {dimension_numbers = #tpu.dot_dimension_numbers<[0], [0], [1], [1], [0, 1, 1, 1], [], []>} : vector<16x64xf32>, vector<16x16xf32>, vector<64x16xf32> -> vector<64x16xf32>
    %c0_28 = arith.constant 0 : index
    %c0_29 = arith.constant 0 : index
    %30 = vector.load %arg10[%c0_28, %c0_29] : memref<1x16xf32, #tpu.memory_space<vmem>>, vector<1x16xf32>
    %31 = vector.broadcast %30 : vector<1x16xf32> to vector<64x16xf32>
    %32 = arith.addf %29, %31 : vector<64x16xf32>
    %cst_30 = arith.constant 0.000000e+00 : f32
    %33 = vector.broadcast %cst_30 : f32 to vector<64x16xf32>
    %34 = arith.maximumf %32, %33 : vector<64x16xf32>
    %35 = arith.truncf %34 : vector<64x16xf32> to vector<64x16xbf16>
    %c0_31 = arith.constant 0 : index
    %c0_32 = arith.constant 0 : index
    %c0_33 = arith.constant 0 : index
    %36 = vector.load %arg13[%c0_31, %c0_32, %c0_33] : memref<1x64x16xbf16, #tpu.memory_space<vmem>>, vector<1x64x16xbf16>
    %37 = vector.shape_cast %36 : vector<1x64x16xbf16> to vector<64x16xbf16>
    %38 = vector.shape_cast %35 : vector<64x16xbf16> to vector<1x64x16xbf16>
    tpu.vector_store %arg13[%c0_31, %c0_32, %c0_33], %38 {strides = array<i32>} : memref<1x64x16xbf16, #tpu.memory_space<vmem>>, vector<1x64x16xbf16>,
    return
  }
  func.func @transform_0(%arg0: i32, %arg1: i32) -> (i32, i32, i32) {
    %c0_i32 = arith.constant 0 : i32
    %c0_i32_0 = arith.constant 0 : i32
    return %arg0, %c0_i32, %arg1 : i32, i32, i32
  }
  func.func @transform_1(%arg0: i32, %arg1: i32) -> (i32, i32, i32) {
    %c0_i32 = arith.constant 0 : i32
    %c0_i32_0 = arith.constant 0 : i32
    return %arg0, %c0_i32, %arg1 : i32, i32, i32
  }
  func.func @transform_2(%arg0: i32, %arg1: i32) -> (i32, i32, i32) {
    %c0_i32 = arith.constant 0 : i32
    %c0_i32_0 = arith.constant 0 : i32
    return %arg0, %c0_i32, %arg1 : i32, i32, i32
  }
  func.func @transform_3(%arg0: i32, %arg1: i32) -> (i32, i32) {
    %c0_i32 = arith.constant 0 : i32
    %c0_i32_0 = arith.constant 0 : i32
    %c0_i32_1 = arith.constant 0 : i32
    return %c0_i32, %c0_i32_0 : i32, i32
  }
  func.func @transform_4(%arg0: i32, %arg1: i32) -> (i32, i32) {
    %c0_i32 = arith.constant 0 : i32
    %c0_i32_0 = arith.constant 0 : i32
    %c0_i32_1 = arith.constant 0 : i32
    return %c0_i32, %c0_i32_0 : i32, i32
  }
  func.func @transform_5(%arg0: i32, %arg1: i32) -> (i32, i32) {
    %c0_i32 = arith.constant 0 : i32
    %c0_i32_0 = arith.constant 0 : i32
    %c0_i32_1 = arith.constant 0 : i32
    return %c0_i32, %c0_i32_0 : i32, i32
  }
  func.func @transform_6(%arg0: i32, %arg1: i32) -> (i32, i32) {
    %c0_i32 = arith.constant 0 : i32
    %c0_i32_0 = arith.constant 0 : i32
    %c0_i32_1 = arith.constant 0 : i32
    return %c0_i32, %c0_i32_0 : i32, i32
  }
  func.func @transform_7(%arg0: i32, %arg1: i32) -> (i32, i32) {
    %c0_i32 = arith.constant 0 : i32
    %c0_i32_0 = arith.constant 0 : i32
    %c0_i32_1 = arith.constant 0 : i32
    return %c0_i32, %c0_i32_0 : i32, i32
  }
  func.func @transform_8(%arg0: i32, %arg1: i32) -> (i32, i32) {
    %c0_i32 = arith.constant 0 : i32
    %c0_i32_0 = arith.constant 0 : i32
    %c0_i32_1 = arith.constant 0 : i32
    return %c0_i32, %c0_i32_0 : i32, i32
  }
  func.func @transform_9(%arg0: i32, %arg1: i32) -> (i32, i32, i32) {
    %c0_i32 = arith.constant 0 : i32
    %c0_i32_0 = arith.constant 0 : i32
    return %arg0, %arg1, %c0_i32 : i32, i32, i32
  }
  func.func @transform_10(%arg0: i32, %arg1: i32) -> (i32, i32, i32) {
    %c0_i32 = arith.constant 0 : i32
    %c0_i32_0 = arith.constant 0 : i32
    return %arg0, %arg1, %c0_i32 : i32, i32, i32
  }
  func.func @transform_11(%arg0: i32, %arg1: i32) -> (i32, i32, i32) {
    %c0_i32 = arith.constant 0 : i32
    %c0_i32_0 = arith.constant 0 : i32
    return %arg0, %arg1, %c0_i32 : i32, i32, i32
  }
}

module attributes {stable_mosaic.version = 11 : i64} {
  func.func @_flash_kernel(%arg0: i32, %arg1: i32, %arg2: i32, %arg3: memref<1x64x4xbf16, #tpu.memory_space<vmem>>, %arg4: memref<1x32x4xbf16, #tpu.memory_space<vmem>>, %arg5: memref<1x32x16xbf16, #tpu.memory_space<vmem>>, %arg6: memref<1x16x64xf32, #tpu.memory_space<vmem>>, %arg7: memref<1xf32, #tpu.memory_space<smem>>, %arg8: memref<1x16x64xf32, #tpu.memory_space<vmem>>, %arg9: memref<1x64xf32, #tpu.memory_space<vmem>>, %arg10: memref<1x64xf32, #tpu.memory_space<vmem>>, %arg11: memref<16x64xf32, #tpu.memory_space<vmem>>) attributes {dimension_semantics = [#tpu.dimension_semantics<parallel>, #tpu.dimension_semantics<parallel>, #tpu.dimension_semantics<arbitrary>], iteration_bounds = array<i64: 2, 1, 2>, scalar_prefetch = 0 : i64, scratch_operands = 3 : i64, tpu.core_type = #tpu.core_type<tc>, window_params = [{transform_indices = @transform_0, window_bounds = array<i64: 1, 64, 4>}, {transform_indices = @transform_1, window_bounds = array<i64: 1, 32, 4>}, {transform_indices = @transform_2, window_bounds = array<i64: 1, 32, 16>}, {transform_indices = @transform_3, window_bounds = array<i64: 1, 16, 64>}, {transform_indices = @transform_4, window_bounds = array<i64: 1>}, {transform_indices = @transform_5, window_bounds = array<i64: 1, 16, 64>}]} {
    %c0_i32 = arith.constant 0 : i32
    %0 = arith.cmpi eq, %arg2, %c0_i32 : i32
    %1 = arith.extui %0 : i1 to i32
    %c0_i32_0 = arith.constant 0 : i32
    %2 = arith.cmpi ne, %1, %c0_i32_0 : i32
    scf.if %2 {
      %cst_25 = arith.constant 0xFF800000 : f32
      %36 = vector.broadcast %cst_25 : f32 to vector<1x64xf32>
      %c0_26 = arith.constant 0 : index
      %c0_27 = arith.constant 0 : index
      %37 = vector.load %arg9[%c0_26, %c0_27] : memref<1x64xf32, #tpu.memory_space<vmem>>, vector<1x64xf32>
      tpu.vector_store %arg9[%c0_26, %c0_27], %36 {strides = array<i32>} : memref<1x64xf32, #tpu.memory_space<vmem>>, vector<1x64xf32>,
      %cst_28 = arith.constant 0.000000e+00 : f32
      %38 = vector.broadcast %cst_28 : f32 to vector<1x64xf32>
      %c0_29 = arith.constant 0 : index
      %c0_30 = arith.constant 0 : index
      %39 = vector.load %arg10[%c0_29, %c0_30] : memref<1x64xf32, #tpu.memory_space<vmem>>, vector<1x64xf32>
      tpu.vector_store %arg10[%c0_29, %c0_30], %38 {strides = array<i32>} : memref<1x64xf32, #tpu.memory_space<vmem>>, vector<1x64xf32>,
      %cst_31 = arith.constant 0.000000e+00 : f32
      %40 = vector.broadcast %cst_31 : f32 to vector<16x64xf32>
      %c0_32 = arith.constant 0 : index
      %c0_33 = arith.constant 0 : index
      %41 = vector.load %arg11[%c0_32, %c0_33] : memref<16x64xf32, #tpu.memory_space<vmem>>, vector<16x64xf32>
      tpu.vector_store %arg11[%c0_32, %c0_33], %40 {strides = array<i32>} : memref<16x64xf32, #tpu.memory_space<vmem>>, vector<16x64xf32>,
    } else {
    }
    %c0 = arith.constant 0 : index
    %c0_1 = arith.constant 0 : index
    %c0_2 = arith.constant 0 : index
    %3 = vector.load %arg4[%c0, %c0_1, %c0_2] : memref<1x32x4xbf16, #tpu.memory_space<vmem>>, vector<1x32x4xbf16>
    %4 = vector.shape_cast %3 : vector<1x32x4xbf16> to vector<32x4xbf16>
    %c0_3 = arith.constant 0 : index
    %c0_4 = arith.constant 0 : index
    %c0_5 = arith.constant 0 : index
    %5 = vector.load %arg3[%c0_3, %c0_4, %c0_5] : memref<1x64x4xbf16, #tpu.memory_space<vmem>>, vector<1x64x4xbf16>
    %6 = vector.shape_cast %5 : vector<1x64x4xbf16> to vector<64x4xbf16>
    %cst = arith.constant dense<0.000000e+00> : vector<32x64xf32>
    %7 = tpu.matmul %4, %6, %cst {dimension_numbers = #tpu.dot_dimension_numbers<[1], [1], [0], [0], [0, 0, 1, 0], [], []>} : vector<32x4xbf16>, vector<64x4xbf16>, vector<32x64xf32> -> vector<32x64xf32>
    %c0_6 = arith.constant 0 : index
    %c0_7 = arith.constant 0 : index
    %8 = vector.load %arg9[%c0_6, %c0_7] : memref<1x64xf32, #tpu.memory_space<vmem>>, vector<1x64xf32>
    %cst_8 = arith.constant dense<0xFF800000> : vector<64xf32>
    %9 = vector.multi_reduction <maximumf>, %7, %cst_8 [0] : vector<32x64xf32> to vector<64xf32>
    %10 = vector.shape_cast %9 : vector<64xf32> to vector<1x64xf32>
    %11 = arith.maximumf %8, %10 : vector<1x64xf32>
    %12 = arith.subf %8, %11 : vector<1x64xf32>
    %13 = math.exp %12 : vector<1x64xf32>
    %14 = vector.broadcast %11 : vector<1x64xf32> to vector<32x64xf32>
    %15 = arith.subf %7, %14 : vector<32x64xf32>
    %16 = math.exp %15 : vector<32x64xf32>
    %c0_9 = arith.constant 0 : index
    %c0_10 = arith.constant 0 : index
    %17 = vector.load %arg10[%c0_9, %c0_10] : memref<1x64xf32, #tpu.memory_space<vmem>>, vector<1x64xf32>
    %18 = arith.mulf %13, %17 : vector<1x64xf32>
    %cst_11 = arith.constant dense<0.000000e+00> : vector<64xf32>
    %19 = vector.multi_reduction <add>, %16, %cst_11 [0] : vector<32x64xf32> to vector<64xf32>
    %20 = vector.shape_cast %19 : vector<64xf32> to vector<1x64xf32>
    %21 = arith.addf %18, %20 : vector<1x64xf32>
    %c0_12 = arith.constant 0 : index
    %c0_13 = arith.constant 0 : index
    %22 = vector.load %arg10[%c0_12, %c0_13] : memref<1x64xf32, #tpu.memory_space<vmem>>, vector<1x64xf32>
    tpu.vector_store %arg10[%c0_12, %c0_13], %21 {strides = array<i32>} : memref<1x64xf32, #tpu.memory_space<vmem>>, vector<1x64xf32>,
    %c0_14 = arith.constant 0 : index
    %c0_15 = arith.constant 0 : index
    %23 = vector.load %arg11[%c0_14, %c0_15] : memref<16x64xf32, #tpu.memory_space<vmem>>, vector<16x64xf32>
    %24 = vector.broadcast %13 : vector<1x64xf32> to vector<16x64xf32>
    %25 = arith.mulf %24, %23 : vector<16x64xf32>
    %c0_16 = arith.constant 0 : index
    %c0_17 = arith.constant 0 : index
    %c0_18 = arith.constant 0 : index
    %26 = vector.load %arg5[%c0_16, %c0_17, %c0_18] : memref<1x32x16xbf16, #tpu.memory_space<vmem>>, vector<1x32x16xbf16>
    %27 = vector.shape_cast %26 : vector<1x32x16xbf16> to vector<32x16xbf16>
    %28 = arith.truncf %16 : vector<32x64xf32> to vector<32x64xbf16>
    %cst_19 = arith.constant dense<0.000000e+00> : vector<16x64xf32>
    %29 = tpu.matmul %27, %28, %cst_19 {dimension_numbers = #tpu.dot_dimension_numbers<[0], [0], [1], [1], [0, 1, 1, 1], [], []>} : vector<32x16xbf16>, vector<32x64xbf16>, vector<16x64xf32> -> vector<16x64xf32>
    %30 = arith.addf %25, %29 : vector<16x64xf32>
    %c0_20 = arith.constant 0 : index
    %c0_21 = arith.constant 0 : index
    %31 = vector.load %arg11[%c0_20, %c0_21] : memref<16x64xf32, #tpu.memory_space<vmem>>, vector<16x64xf32>
    tpu.vector_store %arg11[%c0_20, %c0_21], %30 {strides = array<i32>} : memref<16x64xf32, #tpu.memory_space<vmem>>, vector<16x64xf32>,
    %c0_22 = arith.constant 0 : index
    %c0_23 = arith.constant 0 : index
    %32 = vector.load %arg9[%c0_22, %c0_23] : memref<1x64xf32, #tpu.memory_space<vmem>>, vector<1x64xf32>
    tpu.vector_store %arg9[%c0_22, %c0_23], %11 {strides = array<i32>} : memref<1x64xf32, #tpu.memory_space<vmem>>, vector<1x64xf32>,
    %c1_i32 = arith.constant 1 : i32
    %33 = arith.cmpi eq, %arg2, %c1_i32 : i32
    %34 = arith.extui %33 : i1 to i32
    %c0_i32_24 = arith.constant 0 : i32
    %35 = arith.cmpi ne, %34, %c0_i32_24 : i32
    scf.if %35 {
      %c0_25 = arith.constant 0 : index
      %c0_26 = arith.constant 0 : index
      %36 = vector.load %arg10[%c0_25, %c0_26] : memref<1x64xf32, #tpu.memory_space<vmem>>, vector<1x64xf32>
      %37 = tpu.reciprocal %36 {approx = true} : vector<1x64xf32> -> vector<1x64xf32>
      %c0_27 = arith.constant 0 : index
      %38 = memref.load %arg7[%c0_27] : memref<1xf32, #tpu.memory_space<smem>>
      %c0_28 = arith.constant 0 : index
      %c0_29 = arith.constant 0 : index
      %39 = vector.load %arg11[%c0_28, %c0_29] : memref<16x64xf32, #tpu.memory_space<vmem>>, vector<16x64xf32>
      %40 = vector.broadcast %37 : vector<1x64xf32> to vector<16x64xf32>
      %41 = arith.mulf %39, %40 : vector<16x64xf32>
      %42 = vector.broadcast %38 : f32 to vector<16x64xf32>
      %43 = arith.mulf %42, %41 : vector<16x64xf32>
      %c0_30 = arith.constant 0 : index
      %c0_31 = arith.constant 0 : index
      %c0_32 = arith.constant 0 : index
      %44 = vector.load %arg6[%c0_30, %c0_31, %c0_32] : memref<1x16x64xf32, #tpu.memory_space<vmem>>, vector<1x16x64xf32>
      %45 = vector.shape_cast %44 : vector<1x16x64xf32> to vector<16x64xf32>
      %46 = arith.addf %43, %45 : vector<16x64xf32>
      %c0_33 = arith.constant 0 : index
      %c0_34 = arith.constant 0 : index
      %c0_35 = arith.constant 0 : index
      %47 = vector.load %arg8[%c0_33, %c0_34, %c0_35] : memref<1x16x64xf32, #tpu.memory_space<vmem>>, vector<1x16x64xf32>
      %48 = vector.shape_cast %47 : vector<1x16x64xf32> to vector<16x64xf32>
      %49 = vector.shape_cast %46 : vector<16x64xf32> to vector<1x16x64xf32>
      tpu.vector_store %arg8[%c0_33, %c0_34, %c0_35], %49 {strides = array<i32>} : memref<1x16x64xf32, #tpu.memory_space<vmem>>, vector<1x16x64xf32>,
    } else {
    }
    return
  }
  func.func @transform_0(%arg0: i32, %arg1: i32, %arg2: i32) -> (i32, i32, i32) {
    %c0_i32 = arith.constant 0 : i32
    %c0_i32_0 = arith.constant 0 : i32
    return %arg0, %arg1, %c0_i32 : i32, i32, i32
  }
  func.func @transform_1(%arg0: i32, %arg1: i32, %arg2: i32) -> (i32, i32, i32) {
    %c0_i32 = arith.constant 0 : i32
    %c0_i32_0 = arith.constant 0 : i32
    return %arg0, %arg2, %c0_i32 : i32, i32, i32
  }
  func.func @transform_2(%arg0: i32, %arg1: i32, %arg2: i32) -> (i32, i32, i32) {
    %c0_i32 = arith.constant 0 : i32
    %c0_i32_0 = arith.constant 0 : i32
    return %arg0, %arg2, %c0_i32 : i32, i32, i32
  }
  func.func @transform_3(%arg0: i32, %arg1: i32, %arg2: i32) -> (i32, i32, i32) {
    %c0_i32 = arith.constant 0 : i32
    %c0_i32_0 = arith.constant 0 : i32
    return %arg0, %c0_i32, %arg1 : i32, i32, i32
  }
  func.func @transform_4(%arg0: i32, %arg1: i32, %arg2: i32) -> i32 {
    %c0_i32 = arith.constant 0 : i32
    %c0_i32_0 = arith.constant 0 : i32
    return %c0_i32 : i32
  }
  func.func @transform_5(%arg0: i32, %arg1: i32, %arg2: i32) -> (i32, i32, i32) {
    %c0_i32 = arith.constant 0 : i32
    %c0_i32_0 = arith.constant 0 : i32
    return %arg0, %c0_i32, %arg1 : i32, i32, i32
  }
}

</mosaic_0001>

<llo_original>
// kernel: gfapm_forward.3
$region0: #{gfapm_forward.3}
  #allocation0 [shape = 'u32[]', space=smem, size = 0x4, offset = 0x4, fixed_abs, tag = 'smem constant byte address 0x4 - core index']
  #allocation1 [shape = 'u32[144,128]{1,0:T(1,128)}', space=vmem, size = 0x12000, scoped, tag = 'internal scratch']
  #allocation2 [shape = 'f32[1,64]{1,0:T(1,128)}', space=vmem, size = 0x200, scoped, tag = 'scratch operand']
  #allocation3 [shape = 'f32[1,64]{1,0:T(1,128)}', space=vmem, size = 0x200, scoped, tag = 'scratch operand']
  #allocation4 [shape = 'f32[16,64]{1,0:T(8,128)}', space=vmem, size = 0x2000, scoped, tag = 'scratch operand']
  #allocation5 [shape = 'f32[1]{0:T(128)S(6)}', space=smem, size = 0x200, scoped, tag = 'scoped memory for gfapm_forward.3']
  %s0 = inlined_call_operand.vmem [shape: bf16[2,64,4], index: 0, kind: input, shape index: {}]
  %s1 = inlined_call_operand.vmem [shape: bf16[2,64,4], index: 1, kind: input, shape index: {}]
  %s2 = inlined_call_operand.vmem [shape: bf16[2,64,16], index: 2, kind: input, shape index: {}]
  %s3 = inlined_call_operand.vmem [shape: f32[2,16,64], index: 3, kind: input, shape index: {}, may-alias: {3,5}]
  %s4 = inlined_call_operand.<no memory space> [shape: f32[1], index: 4, kind: input, shape index: {}]
  %s5 = inlined_call_operand.vmem [shape: f32[2,16,64], index: 5, kind: output, shape index: {}, may-alias: {3,5}]
  %s6 = sld [smem:[#allocation0]]
  $region61: #{gfapm_forward.3} parent=0
    _
  %s8 = ssub.s32 1, %s6
  %s9 = scalar_select 0, %s8, %s6
  %10 = sst [smem:[#allocation5]] %s4
  loop: start=0, step=1, limit=6
  $region2: #{gfapm_forward.3} parent=0 // loop_pre_header
    _
  $region3: #{gfapm_forward.3} parent=0 // loop_header
    %s12 = sphi 0, %s16
    %p13 = scmp.ge.s32.totalorder %s12, 6
    %s19 = sphi 0, %s38
    %s20 = sphi 0, %s34
    %s21 = sphi 0, %s30
    %s22 = sphi 0, %s19
    %s23 = sphi 0, %s20
    %s24 = sphi 0, %s21
    %s25 = sphi 0, %s22
    %s26 = sphi 0, %s23
    %s27 = sphi 0, %s24
    %s43 = sphi 0, %s45
    %s46 = sphi 0, %s43
    %s47 = sphi 0, %s46
    %s63 = sphi 0, %s47
    %s71 = sphi 0, %s73
    %s74 = sphi 0, %s71
    %s75 = sphi 0, %s74
    %s91 = sphi 0, %s75
    %s99 = sphi 0, %s101
    %s102 = sphi 0, %s99
    %s103 = sphi 0, %s102
    %s119 = sphi 0, %s103
    %s127 = sphi 0, %s129
    %s130 = sphi 0, %s127
    %s131 = sphi 0, %s130
    %s147 = sphi 0, %s131
    %s151 = sphi 0, %s151
    %s153 = sphi 0, %s151
    %s154 = sphi 0, %s153
    %s168 = sphi 0, %s154
    %s176 = sphi 0, %s178
    %s179 = sphi 0, %s176
    %s180 = sphi 0, %s179
    %s196 = sphi 0, %s180
  $region4: #{gfapm_forward.3} parent=0 // loop_header_branch
    %15 = sbr.rel (%p13) target = $region8
  $region5: #{gfapm_forward.3} parent=0 // loop_body
    %s17 = ssub.s32 %s12, 1
    %s18 = ssub.s32 %s12, 2
    %s28 = sadd.s32 1, %s21
    %p29 = scmp.ge.s32.totalorder %s28, 2
    %s30 = scalar_select %p29, 0, %s28
    %s31 = sadd.s32 1, %s20
    %s32 = scalar_select %p29, %s31, %s20
    %p33 = scmp.ge.s32.totalorder %s32, 1
    %s34 = scalar_select %p33, 0, %s32
    %s35 = sadd.s32 1, %s19
    %s36 = scalar_select %p33, %s35, %s19
    %p37 = scmp.ge.s32.totalorder %s36, 2
    %s38 = scalar_select %p37, 0, %s36
    %s39 = ssub.s32 %s19, %s38
    %s40 = ssub.s32 %s20, %s34
    %s41 = sor.u32 %s39, %s40
    %p42 = scmp.eq.s32.totalorder %s41, 0
    %s44 = sadd.s32 %s43, 1
    %s45 = scalar_select %p42, %s43, %s44
    %p48 = pneg %p42
    %p49 = scmp.eq.s32.totalorder %s12, 3
    %p50 = por %p48, %p49
    %p51 = scmp.ne.s32.totalorder %s43, %s46
    %p52 = scmp.eq.s32.totalorder %s12, 0
    %p53 = por %p51, %p52
    %p54 = scmp.ne.s32.totalorder %s43, %s46
    %p55 = scmp.eq.s32.totalorder %s17, 3
    %p56 = por %p54, %p55
    %p57 = scmp.ne.s32.totalorder %s46, %s47
    %p58 = scmp.eq.s32.totalorder %s17, 0
    %p59 = por %p57, %p58
    %p60 = scmp.ne.s32.totalorder %s46, %s47
    %p61 = scmp.eq.s32.totalorder %s18, 3
    %p62 = por %p60, %p61
    %p64 = scmp.ne.s32.totalorder %s47, %s63
    %p65 = scmp.eq.s32.totalorder %s18, 0
    %p66 = por %p64, %p65
    %s67 = ssub.s32 %s19, %s38
    %s68 = ssub.s32 %s21, %s30
    %s69 = sor.u32 %s67, %s68
    %p70 = scmp.eq.s32.totalorder %s69, 0
    %s72 = sadd.s32 %s71, 1
    %s73 = scalar_select %p70, %s71, %s72
    %p76 = pneg %p70
    %p77 = scmp.eq.s32.totalorder %s12, 3
    %p78 = por %p76, %p77
    %p79 = scmp.ne.s32.totalorder %s71, %s74
    %p80 = scmp.eq.s32.totalorder %s12, 0
    %p81 = por %p79, %p80
    %p82 = scmp.ne.s32.totalorder %s71, %s74
    %p83 = scmp.eq.s32.totalorder %s17, 3
    %p84 = por %p82, %p83
    %p85 = scmp.ne.s32.totalorder %s74, %s75
    %p86 = scmp.eq.s32.totalorder %s17, 0
    %p87 = por %p85, %p86
    %p88 = scmp.ne.s32.totalorder %s74, %s75
    %p89 = scmp.eq.s32.totalorder %s18, 3
    %p90 = por %p88, %p89
    %p92 = scmp.ne.s32.totalorder %s75, %s91
    %p93 = scmp.eq.s32.totalorder %s18, 0
    %p94 = por %p92, %p93
    %s95 = ssub.s32 %s19, %s38
    %s96 = ssub.s32 %s21, %s30
    %s97 = sor.u32 %s95, %s96
    %p98 = scmp.eq.s32.totalorder %s97, 0
    %s100 = sadd.s32 %s99, 1
    %s101 = scalar_select %p98, %s99, %s100
    %p104 = pneg %p98
    %p105 = scmp.eq.s32.totalorder %s12, 3
    %p106 = por %p104, %p105
    %p107 = scmp.ne.s32.totalorder %s99, %s102
    %p108 = scmp.eq.s32.totalorder %s12, 0
    %p109 = por %p107, %p108
    %p110 = scmp.ne.s32.totalorder %s99, %s102
    %p111 = scmp.eq.s32.totalorder %s17, 3
    %p112 = por %p110, %p111
    %p113 = scmp.ne.s32.totalorder %s102, %s103
    %p114 = scmp.eq.s32.totalorder %s17, 0
    %p115 = por %p113, %p114
    %p116 = scmp.ne.s32.totalorder %s102, %s103
    %p117 = scmp.eq.s32.totalorder %s18, 3
    %p118 = por %p116, %p117
    %p120 = scmp.ne.s32.totalorder %s103, %s119
    %p121 = scmp.eq.s32.totalorder %s18, 0
    %p122 = por %p120, %p121
    %s123 = ssub.s32 %s19, %s38
    %s124 = ssub.s32 %s20, %s34
    %s125 = sor.u32 %s123, %s124
    %p126 = scmp.eq.s32.totalorder %s125, 0
    %s128 = sadd.s32 %s127, 1
    %s129 = scalar_select %p126, %s127, %s128
    %p132 = pneg %p126
    %p133 = scmp.eq.s32.totalorder %s12, 3
    %p134 = por %p132, %p133
    %p135 = scmp.ne.s32.totalorder %s127, %s130
    %p136 = scmp.eq.s32.totalorder %s12, 0
    %p137 = por %p135, %p136
    %p138 = scmp.ne.s32.totalorder %s127, %s130
    %p139 = scmp.eq.s32.totalorder %s17, 3
    %p140 = por %p138, %p139
    %p141 = scmp.ne.s32.totalorder %s130, %s131
    %p142 = scmp.eq.s32.totalorder %s17, 0
    %p143 = por %p141, %p142
    %p144 = scmp.ne.s32.totalorder %s130, %s131
    %p145 = scmp.eq.s32.totalorder %s18, 3
    %p146 = por %p144, %p145
    %p148 = scmp.ne.s32.totalorder %s131, %s147
    %p149 = scmp.eq.s32.totalorder %s18, 0
    %p150 = por %p148, %p149
    %s152 = sadd.s32 %s151, 1
    %p155 = scmp.eq.s32.totalorder %s12, 3
    %p156 = scmp.ne.s32.totalorder %s151, %s153
    %p157 = scmp.eq.s32.totalorder %s12, 0
    %p158 = por %p156, %p157
    %p159 = scmp.ne.s32.totalorder %s151, %s153
    %p160 = scmp.eq.s32.totalorder %s17, 3
    %p161 = por %p159, %p160
    %p162 = scmp.ne.s32.totalorder %s153, %s154
    %p163 = scmp.eq.s32.totalorder %s17, 0
    %p164 = por %p162, %p163
    %p165 = scmp.ne.s32.totalorder %s153, %s154
    %p166 = scmp.eq.s32.totalorder %s18, 3
    %p167 = por %p165, %p166
    %p169 = scmp.ne.s32.totalorder %s154, %s168
    %p170 = scmp.eq.s32.totalorder %s18, 0
    %p171 = por %p169, %p170
    %s172 = ssub.s32 %s19, %s38
    %s173 = ssub.s32 %s20, %s34
    %s174 = sor.u32 %s172, %s173
    %p175 = scmp.eq.s32.totalorder %s174, 0
    %s177 = sadd.s32 %s176, 1
    %s178 = scalar_select %p175, %s176, %s177
    %p181 = pneg %p175
    %p182 = scmp.eq.s32.totalorder %s12, 3
    %p183 = por %p181, %p182
    %p184 = scmp.ne.s32.totalorder %s176, %s179
    %p185 = scmp.eq.s32.totalorder %s12, 0
    %p186 = por %p184, %p185
    %p187 = scmp.ne.s32.totalorder %s176, %s179
    %p188 = scmp.eq.s32.totalorder %s17, 3
    %p189 = por %p187, %p188
    %p190 = scmp.ne.s32.totalorder %s179, %s180
    %p191 = scmp.eq.s32.totalorder %s17, 0
    %p192 = por %p190, %p191
    %p193 = scmp.ne.s32.totalorder %s179, %s180
    %p194 = scmp.eq.s32.totalorder %s18, 3
    %p195 = por %p193, %p194
    %p197 = scmp.ne.s32.totalorder %s180, %s196
    %p198 = scmp.eq.s32.totalorder %s18, 0
    %p199 = por %p197, %p198
    %p200 = scmp.le.s32.totalorder 1, %s12
    %p201 = scmp.lt.s32.totalorder %s12, 5
    %p202 = pnand %p200, %p201
    %p203 = pneg %p202
    // Predicated region
    $region9: #{gfapm_forward.3} parent=5 // pred_check
      _
    $region10: #{gfapm_forward.3} parent=5 // pred_check_branch
      %205 = sbr.rel (%p202) target = $region12
    $region11: #{gfapm_forward.3} parent=5 // pred_region
      %s206 = ssub.s32 %s12, 1
      // Predicated region
      $region13: #{gfapm_forward.3} parent=11 // pred_check
        %p207 = pneg %p164
      $region14: #{gfapm_forward.3} parent=11 // pred_check_branch
        %209 = sbr.rel (%p207) target = $region16
      $region15: #{gfapm_forward.3} parent=11 // pred_region
        _
      $region16: #{gfapm_forward.3} parent=11 // pred_fallthru
        _
    $region12: #{gfapm_forward.3} parent=5 // pred_fallthru
      _
    %p210 = scmp.lt.s32.totalorder %s12, 4
    // Predicated region
    $region17: #{gfapm_forward.3} parent=5 // pred_check
      %p211 = pneg %p210
    $region18: #{gfapm_forward.3} parent=5 // pred_check_branch
      %213 = sbr.rel (%p211) target = $region20
    $region19: #{gfapm_forward.3} parent=5 // pred_region
      // Predicated region
      $region21: #{gfapm_forward.3} parent=19 // pred_check
        %p214 = pneg %p53
      $region22: #{gfapm_forward.3} parent=19 // pred_check_branch
        %216 = sbr.rel (%p214) target = $region24
      $region23: #{gfapm_forward.3} parent=19 // pred_region
        %s217 = smul.u32 8, %s20
        %p218 = scmp.lt.s32.totalorder %s19, 1
        %s219 = scalar_select %p218, %s19, 1
        %p220 = scmp.lt.s32.totalorder %s217, 7
        %s221 = scalar_select %p220, %s217, 7
        %s222 = smul.addr %s219, 8
        %s223 = sadd.s32 %s221, %s222
        %s224 = smul.addr %s223, 4
        %s225 = scalar_lea.vmem %s0, %s224
        %s226 = smul.u32 8, %s20
      $region24: #{gfapm_forward.3} parent=19 // pred_fallthru
        _
      // Predicated region
      $region25: #{gfapm_forward.3} parent=19 // pred_check
        %p227 = pneg %p81
      $region26: #{gfapm_forward.3} parent=19 // pred_check_branch
        %229 = sbr.rel (%p227) target = $region28
      $region27: #{gfapm_forward.3} parent=19 // pred_region
        %s230 = smul.u32 4, %s21
        %p231 = scmp.lt.s32.totalorder %s19, 1
        %s232 = scalar_select %p231, %s19, 1
        %p233 = scmp.lt.s32.totalorder %s230, 7
        %s234 = scalar_select %p233, %s230, 7
        %s235 = smul.addr %s232, 8
        %s236 = sadd.s32 %s234, %s235
        %s237 = smul.addr %s236, 4
        %s238 = scalar_lea.vmem %s1, %s237
        %s239 = smul.u32 4, %s21
      $region28: #{gfapm_forward.3} parent=19 // pred_fallthru
        _
      // Predicated region
      $region29: #{gfapm_forward.3} parent=19 // pred_check
        %p240 = pneg %p109
      $region30: #{gfapm_forward.3} parent=19 // pred_check_branch
        %242 = sbr.rel (%p240) target = $region32
      $region31: #{gfapm_forward.3} parent=19 // pred_region
        %s243 = smul.u32 4, %s21
        %p244 = scmp.lt.s32.totalorder %s19, 1
        %s245 = scalar_select %p244, %s19, 1
        %p246 = scmp.lt.s32.totalorder %s243, 7
        %s247 = scalar_select %p246, %s243, 7
        %s248 = smul.addr %s245, 8
        %s249 = sadd.s32 %s247, %s248
        %s250 = smul.addr %s249, 4
        %s251 = scalar_lea.vmem %s2, %s250
        %s252 = smul.u32 4, %s21
      $region32: #{gfapm_forward.3} parent=19 // pred_fallthru
        _
      // Predicated region
      $region33: #{gfapm_forward.3} parent=19 // pred_check
        %p253 = pneg %p137
      $region34: #{gfapm_forward.3} parent=19 // pred_check_branch
        %255 = sbr.rel (%p253) target = $region36
      $region35: #{gfapm_forward.3} parent=19 // pred_region
        %p256 = scmp.lt.s32.totalorder %s19, 1
        %s257 = scalar_select %p256, %s19, 1
        %p258 = scmp.lt.s32.totalorder %s20, 0
        %s259 = scalar_select %p258, %s20, 0
        %s260 = smul.addr %s257, 2
        %s261 = sadd.s32 %s259, %s260
        %s262 = smul.addr %s261, 8
        %s263 = scalar_lea.vmem %s3, %s262
      $region36: #{gfapm_forward.3} parent=19 // pred_fallthru
        _
    $region20: #{gfapm_forward.3} parent=5 // pred_fallthru
      _
    %p264 = scmp.le.s32.totalorder 1, %s12
    %p265 = scmp.lt.s32.totalorder %s12, 5
    %p266 = pnand %p264, %p265
    %p267 = pneg %p266
    // Predicated region
    $region37: #{gfapm_forward.3} parent=5 // pred_check
      _
    $region38: #{gfapm_forward.3} parent=5 // pred_check_branch
      %269 = sbr.rel (%p266) target = $region40
    $region39: #{gfapm_forward.3} parent=5 // pred_region
      %s270 = ssub.s32 %s12, 1
      %s271 = smul.u32 8, %s23
      %p272 = scmp.lt.s32.totalorder %s22, 1
      %s273 = scalar_select %p272, %s22, 1
      %p274 = scmp.lt.s32.totalorder %s271, 7
      %s275 = scalar_select %p274, %s271, 7
      %s276 = smul.addr %s273, 8
      %s277 = sadd.s32 %s275, %s276
      %s278 = smul.addr %s277, 4
      %s279 = scalar_lea.vmem %s0, %s278
      %p280 = pneg %p59
      %p281 = pneg %p56
      %s282 = smul.u32 4, %s24
      %p283 = scmp.lt.s32.totalorder %s22, 1
      %s284 = scalar_select %p283, %s22, 1
      %p285 = scmp.lt.s32.totalorder %s282, 7
      %s286 = scalar_select %p285, %s282, 7
      %s287 = smul.addr %s284, 8
      %s288 = sadd.s32 %s286, %s287
      %s289 = smul.addr %s288, 4
      %s290 = scalar_lea.vmem %s1, %s289
      %p291 = pneg %p87
      %p292 = pneg %p84
      %s293 = smul.u32 4, %s24
      %p294 = scmp.lt.s32.totalorder %s22, 1
      %s295 = scalar_select %p294, %s22, 1
      %p296 = scmp.lt.s32.totalorder %s293, 7
      %s297 = scalar_select %p296, %s293, 7
      %s298 = smul.addr %s295, 8
      %s299 = sadd.s32 %s297, %s298
      %s300 = smul.addr %s299, 4
      %s301 = scalar_lea.vmem %s2, %s300
      %p302 = pneg %p115
      %p303 = pneg %p112
      %p304 = scmp.lt.s32.totalorder %s22, 1
      %s305 = scalar_select %p304, %s22, 1
      %p306 = scmp.lt.s32.totalorder %s23, 0
      %s307 = scalar_select %p306, %s23, 0
      %s308 = smul.addr %s305, 2
      %s309 = sadd.s32 %s307, %s308
      %s310 = smul.addr %s309, 8
      %s311 = scalar_lea.vmem %s3, %s310
      %p312 = pneg %p143
      %p313 = pneg %p140
      %p314 = pneg %p164
      %p315 = pneg %p161
      %p316 = pneg %p192
      %p317 = pneg %p189
      %p318 = scmp.lt.s32.totalorder %s22, 1
      %s319 = scalar_select %p318, %s22, 1
      %p320 = scmp.lt.s32.totalorder %s23, 0
      %s321 = scalar_select %p320, %s23, 0
      %s322 = smul.addr %s319, 2
      %s323 = sadd.s32 %s321, %s322
      %s324 = smul.addr %s323, 8
      %s325 = scalar_lea.vmem %s5, %s324
      %s326 = smul.u32 8, %s23
      %p327 = scmp.lt.s32.totalorder %s22, 1
      %s328 = scalar_select %p327, %s22, 1
      %p329 = scmp.lt.s32.totalorder %s326, 7
      %s330 = scalar_select %p329, %s326, 7
      %s331 = smul.addr %s328, 8
      %s332 = sadd.s32 %s330, %s331
      %s333 = smul.addr %s332, 4
      %s334 = scalar_lea.vmem %s0, %s333
      %s335 = smul.u32 8, %s23
      %s336 = smul.u32 4, %s24
      %p337 = scmp.lt.s32.totalorder %s22, 1
      %s338 = scalar_select %p337, %s22, 1
      %p339 = scmp.lt.s32.totalorder %s336, 7
      %s340 = scalar_select %p339, %s336, 7
      %s341 = smul.addr %s338, 8
      %s342 = sadd.s32 %s340, %s341
      %s343 = smul.addr %s342, 4
      %s344 = scalar_lea.vmem %s1, %s343
      %s345 = smul.u32 4, %s24
      %s346 = smul.u32 4, %s24
      %p347 = scmp.lt.s32.totalorder %s22, 1
      %s348 = scalar_select %p347, %s22, 1
      %p349 = scmp.lt.s32.totalorder %s346, 7
      %s350 = scalar_select %p349, %s346, 7
      %s351 = smul.addr %s348, 8
      %s352 = sadd.s32 %s350, %s351
      %s353 = smul.addr %s352, 4
      %s354 = scalar_lea.vmem %s2, %s353
      %s355 = smul.u32 4, %s24
      %p356 = scmp.lt.s32.totalorder %s22, 1
      %s357 = scalar_select %p356, %s22, 1
      %p358 = scmp.lt.s32.totalorder %s23, 0
      %s359 = scalar_select %p358, %s23, 0
      %s360 = smul.addr %s357, 2
      %s361 = sadd.s32 %s359, %s360
      %s362 = smul.addr %s361, 8
      %s363 = scalar_lea.vmem %s3, %s362
      %p364 = scmp.lt.s32.totalorder %s22, 1
      %s365 = scalar_select %p364, %s22, 1
      %p366 = scmp.lt.s32.totalorder %s23, 0
      %s367 = scalar_select %p366, %s23, 0
      %s368 = smul.addr %s365, 2
      %s369 = sadd.s32 %s367, %s368
      %s370 = smul.addr %s369, 8
      %s371 = scalar_lea.vmem %s5, %s370
      %p373 = scmp.eq.s32.totalorder %s24, 0
      // Predicated region
      $region41: #{gfapm_forward.3} parent=39 // pred_check
        %p374 = pneg %p373
      $region42: #{gfapm_forward.3} parent=39 // pred_check_branch
        %376 = sbr.rel (%p374) target = $region44
      $region43: #{gfapm_forward.3} parent=39 // pred_region
        %vm377 = vcmask 516096
        %378 = vst.msk [vmem:[#allocation2] sm:$0x1] %vm377, -inf
        %379 = vst.msk [vmem:[#allocation3] sm:$0x1] %vm377, 0.0
        %vm380 = vcmask 523264
        %381 = vst.msk [vmem:[#allocation4] sm:$0xff] %vm380, 0.0
        %382 = vst.msk [vmem:[#allocation4 + $0x8] sm:$0xff] %vm380, 0.0
      $region44: #{gfapm_forward.3} parent=39 // pred_fallthru
        _
      %v383 = vld [vmem:[%s344] sm:$0xf]
      %v384 = vld [vmem:[%s344 + $0x4] sm:$0xf]
      %v385 = vld [vmem:[%s344 + $0x8] sm:$0xf]
      %v386 = vld [vmem:[%s344 + $0xc] sm:$0xf]
      %v387 = vld [vmem:[%s334] sm:$0xf]
      %v388 = vld [vmem:[%s334 + $0x4] sm:$0xf]
      %v389 = vld [vmem:[%s334 + $0x8] sm:$0xf]
      %v390 = vld [vmem:[%s334 + $0xc] sm:$0xf]
      %v391 = vld [vmem:[%s334 + $0x10] sm:$0xf]
      %v392 = vld [vmem:[%s334 + $0x14] sm:$0xf]
      %v393 = vld [vmem:[%s334 + $0x18] sm:$0xf]
      %v394 = vld [vmem:[%s334 + $0x1c] sm:$0xf]
      %v399 = vunpack.c.l.b16 %v383
      %v400 = vunpack.c.l.b16 %v384
      %v401 = vunpack.c.l.b16 %v385
      %v402 = vunpack.c.l.b16 %v386
      %v403 = vpack.c.b16 %v400, %v399
      %v404 = vpack.c.b16 %v402, %v401
      %v413 = vunpack.c.l.b16 %v387
      %v414 = vunpack.c.l.b16 %v388
      %v415 = vunpack.c.l.b16 %v389
      %v416 = vunpack.c.l.b16 %v390
      %v417 = vunpack.c.l.b16 %v391
      %v418 = vunpack.c.l.b16 %v392
      %v419 = vunpack.c.l.b16 %v393
      %v420 = vunpack.c.l.b16 %v394
      %v421 = vpack.c.b16 %v414, %v413
      %v422 = vpack.c.b16 %v416, %v415
      %v423 = vpack.c.b16 %v418, %v417
      %v424 = vpack.c.b16 %v420, %v419
      %vm425 = vcmask 31744
      %v427 = vsel %vm425, %v403, 0
      %v430 = vsel %vm425, %v404, 0
      %v433 = vsel %vm425, %v421, 0
      %v436 = vsel %vm425, %v422, 0
      %v439 = vsel %vm425, %v423, 0
      %v442 = vsel %vm425, %v424, 0
      %444 = vmatprep.subr.bf16.mxu0 0
      %445 = vmatpush1.bf16.xpose.msra.mxu0 0
      %446 = vmatprep.subr.bf16.mxu0 0
      %447 = vmatpush1.bf16.xpose.msra.mxu0 0
      %448 = vmatprep.subr.bf16.mxu0 0
      %449 = vmatpush1.bf16.xpose.msra.mxu0 0
      %450 = vmatprep.subr.bf16.mxu0 0
      %451 = vmatpush1.bf16.xpose.msra.mxu0 0
      %452 = vmatprep.subr.bf16.mxu0 0
      %453 = vmatpush1.bf16.xpose.msra.mxu0 %v442
      %454 = vmatprep.subr.bf16.mxu0 0
      %455 = vmatpush1.bf16.xpose.msra.mxu0 %v439
      %456 = vmatprep.subr.bf16.mxu0 0
      %457 = vmatpush1.bf16.xpose.msra.mxu0 %v436
      %458 = vmatprep.subr.bf16.mxu0 0
      %459 = vmatpush1.bf16.xpose.msra.mxu0 %v433
      %460 = vmatprep.subr.bf16.mxu0 0
      %461 = vmatpush2.bf16.xpose.msra.mxu0 0
      %462 = vmatprep.subr.bf16.mxu0 0
      %463 = vmatpush2.bf16.xpose.msra.mxu0 0
      %464 = vmatprep.subr.bf16.mxu0 0
      %465 = vmatpush2.bf16.xpose.msra.mxu0 0
      %466 = vmatprep.subr.bf16.mxu0 0
      %467 = vmatpush2.bf16.xpose.msra.mxu0 0
      %468 = vmatprep.subr.bf16.mxu0 0
      %469 = vmatpush2.bf16.xpose.msra.mxu0 0
      %470 = vmatprep.subr.bf16.mxu0 0
      %471 = vmatpush2.bf16.xpose.msra.mxu0 0
      %472 = vmatprep.subr.bf16.mxu0 0
      %473 = vmatpush2.bf16.xpose.msra.mxu0 0
      %474 = vmatprep.subr.bf16.mxu0 0
      %475 = vmatpush2.bf16.xpose.msra.mxu0 0
      %476 = vmatprep.mubr.bf16.mxu0 0
      %477 = vmatmul.mubr.bf16.gmra.mxu0 %v427
      %v478 = vpop.f32.mrf.mxu0
      %v479 = vadd.f32 0.0, %v478
      %v480 = vpop.f32.mrf.mxu0
      %v481 = vpop.f32.mrf.mxu0
      %v482 = vadd.f32 0.0, %v481
      %v483 = vpop.f32.mrf.mxu0
      %484 = vmatprep.mubr.bf16.mxu0 0
      %485 = vmatmul.mubr.bf16.gmra.mxu0 %v430
      %v486 = vpop.f32.mrf.mxu0
      %v487 = vadd.f32 0.0, %v486
      %v488 = vpop.f32.mrf.mxu0
      %v489 = vpop.f32.mrf.mxu0
      %v490 = vadd.f32 0.0, %v489
      %v491 = vpop.f32.mrf.mxu0
      %492 = vdwg.mxu0
      %v493 = vld [vmem:[#allocation2] sm:$0x1]
      %vm494 = vcmask 523264
      %v495 = vsel %vm494, %v479, -inf
      %v496 = vsel %vm494, %v482, -inf
      %v497 = vsel %vm494, %v487, -inf
      %v498 = vsel %vm494, %v490, -inf
      %v499 = vmax.f32 %v495, %v496
      %v500 = vmax.f32 %v497, %v498
      %v501 = vmax.f32 %v499, %v500
      %v502 = vrot.slane %v501, 4
      %v503 = vmax.f32 %v501, %v502
      %v504 = vrot.slane %v503, 2
      %v505 = vmax.f32 %v503, %v504
      %v506 = vrot.slane %v505, 1
      %v507 = vmax.f32 %v505, %v506
      %v508 = vmax.f32 %v493, %v507
      %v509 = vsub.f32 %v493, %v508
      %v510 = vmul.f32 %v509, 1.442695
      %v511 = vpow.pop %v510
      %v513 = vlaneseq
      %v514 = vshrl.u32 %v513, 7
      %v515 = vsub.s32 0, %v514
      %v516 = vrot.slane %v508, %v515
      %v518 = vsub.f32 %v479, %v516
      %v519 = vsub.f32 %v482, %v516
      %v520 = vsub.f32 %v487, %v516
      %v521 = vsub.f32 %v490, %v516
      %v522 = vmul.f32 %v518, 1.442695
      %v523 = vpow.pop %v522
      %v524 = vmul.f32 %v519, 1.442695
      %v525 = vpow.pop %v524
      %v526 = vmul.f32 %v520, 1.442695
      %v527 = vpow.pop %v526
      %v528 = vmul.f32 %v521, 1.442695
      %v529 = vpow.pop %v528
      %v530 = vld [vmem:[#allocation3] sm:$0x1]
      %v531 = vmul.f32 %v511, %v530
      %v532 = vsel %vm494, %v523, 0.0
      %v533 = vsel %vm494, %v525, 0.0
      %v534 = vadd.f32 %v532, %v533
      %v535 = vsel %vm494, %v527, 0.0
      %v536 = vadd.f32 %v534, %v535
      %v537 = vsel %vm494, %v529, 0.0
      %v538 = vadd.f32 %v536, %v537
      %v539 = vrot.slane %v538, 4
      %v540 = vadd.f32 %v538, %v539
      %v541 = vrot.slane %v540, 2
      %v542 = vadd.f32 %v540, %v541
      %v543 = vrot.slane %v542, 1
      %v544 = vadd.f32 %v542, %v543
      %v545 = vadd.f32 %v531, %v544
      %vm546 = vcmask 516096
      %547 = vst.msk [vmem:[#allocation3] sm:$0x1] %vm546, %v545
      %v548 = vld [vmem:[#allocation4] sm:$0xff]
      %v549 = vld [vmem:[#allocation4 + $0x8] sm:$0xff]
      %v551 = vlaneseq
      %v552 = vshrl.u32 %v551, 7
      %v553 = vsub.s32 0, %v552
      %v554 = vrot.slane %v511, %v553
      %v556 = vmul.f32 %v554, %v548
      %v557 = vmul.f32 %v554, %v549
      %v558 = vld [vmem:[%s354] sm:$0xf]
      %v559 = vld [vmem:[%s354 + $0x4] sm:$0xf]
      %v560 = vld [vmem:[%s354 + $0x8] sm:$0xf]
      %v561 = vld [vmem:[%s354 + $0xc] sm:$0xf]
      %v562 = vpack.c.bf16 %v525, %v523
      %v563 = vpack.c.bf16 %v529, %v527
      %v568 = vunpack.c.l.b16 %v558
      %v569 = vunpack.c.l.b16 %v559
      %v570 = vunpack.c.l.b16 %v560
      %v571 = vunpack.c.l.b16 %v561
      %v572 = vpack.c.b16 %v569, %v568
      %v573 = vpack.c.b16 %v571, %v570
      %576 = vxpose.xlu0.c.b16.start [1/8] %v572, 128
      %577 = vxpose.xlu0.c.b16.cont [2/8] %v573, 128
      %578 = vxpose.xlu0.c.b16.cont [3/8] 0, 128
      %579 = vxpose.xlu0.c.b16.cont [4/8] 0, 128
      %580 = vxpose.xlu0.c.b16.cont [5/8] 0, 128
      %581 = vxpose.xlu0.c.b16.cont [6/8] 0, 128
      %582 = vxpose.xlu0.c.b16.cont [7/8] 0, 128
      %583 = vxpose.xlu0.c.b16.end [8/8] 0, 128
      %v584 = vpop.trf.xlu0
      %v585 = vpop.trf.xlu0
      %v586 = vpop.trf.xlu0
      %v587 = vpop.trf.xlu0
      %v588 = vpop.trf.xlu0
      %v589 = vpop.trf.xlu0
      %v590 = vpop.trf.xlu0
      %v591 = vpop.trf.xlu0
      %vm592 = vcmask 261120
      %v594 = vsel %vm592, %v584, 0
      %596 = vmatprep.subr.bf16.mxu0 0
      %597 = vmatpush1.bf16.msra.mxu0 0
      %598 = vmatprep.subr.bf16.mxu0 0
      %599 = vmatpush1.bf16.msra.mxu0 0
      %600 = vmatprep.subr.bf16.mxu0 0
      %601 = vmatpush1.bf16.msra.mxu0 0
      %602 = vmatprep.subr.bf16.mxu0 0
      %603 = vmatpush1.bf16.msra.mxu0 0
      %604 = vmatprep.subr.bf16.mxu0 0
      %605 = vmatpush1.bf16.msra.mxu0 0
      %606 = vmatprep.subr.bf16.mxu0 0
      %607 = vmatpush1.bf16.msra.mxu0 0
      %608 = vmatprep.subr.bf16.mxu0 0
      %609 = vmatpush1.bf16.msra.mxu0 %v563
      %610 = vmatprep.subr.bf16.mxu0 0
      %611 = vmatpush1.bf16.msra.mxu0 %v562
      %612 = vmatprep.subr.bf16.mxu0 0
      %613 = vmatpush2.bf16.msra.mxu0 0
      %614 = vmatprep.subr.bf16.mxu0 0
      %615 = vmatpush2.bf16.msra.mxu0 0
      %616 = vmatprep.subr.bf16.mxu0 0
      %617 = vmatpush2.bf16.msra.mxu0 0
      %618 = vmatprep.subr.bf16.mxu0 0
      %619 = vmatpush2.bf16.msra.mxu0 0
      %620 = vmatprep.subr.bf16.mxu0 0
      %621 = vmatpush2.bf16.msra.mxu0 0
      %622 = vmatprep.subr.bf16.mxu0 0
      %623 = vmatpush2.bf16.msra.mxu0 0
      %624 = vmatprep.subr.bf16.mxu0 0
      %625 = vmatpush2.bf16.msra.mxu0 0
      %626 = vmatprep.subr.bf16.mxu0 0
      %627 = vmatpush2.bf16.msra.mxu0 0
      %628 = vmatprep.mubr.bf16.mxu0 0
      %629 = vmatmul.mubr.bf16.gmra.mxu0 %v594
      %v630 = vpop.f32.mrf.mxu0
      %v631 = vadd.f32 0.0, %v630
      %v632 = vpop.f32.mrf.mxu0
      %v633 = vpop.f32.mrf.mxu0
      %v634 = vadd.f32 0.0, %v633
      %v635 = vpop.f32.mrf.mxu0
      %636 = vdwg.mxu0
      %v637 = vadd.f32 %v556, %v631
      %v638 = vadd.f32 %v557, %v634
      %639 = vst.msk [vmem:[#allocation4] sm:$0xff] %vm494, %v637
      %640 = vst.msk [vmem:[#allocation4 + $0x8] sm:$0xff] %vm494, %v638
      %641 = vst.msk [vmem:[#allocation2] sm:$0x1] %vm546, %v508
      %p642 = scmp.eq.s32.totalorder %s24, 1
      // Predicated region
      $region45: #{gfapm_forward.3} parent=39 // pred_check
        %p643 = pneg %p642
      $region46: #{gfapm_forward.3} parent=39 // pred_check_branch
        %645 = sbr.rel (%p643) target = $region48
      $region47: #{gfapm_forward.3} parent=39 // pred_region
        %v646 = vld [vmem:[#allocation3] sm:$0x1]
        %v647 = vrcp.pop %v646
        %s648 = sld [smem:[#allocation5]]
        %v649 = vld [vmem:[#allocation4] sm:$0xff]
        %v650 = vld [vmem:[#allocation4 + $0x8] sm:$0xff]
        %v652 = vlaneseq
        %v653 = vshrl.u32 %v652, 7
        %v654 = vsub.s32 0, %v653
        %v655 = vrot.slane %v647, %v654
        %v657 = vmul.f32 %v649, %v655
        %v658 = vmul.f32 %v650, %v655
        %v659 = vstv %s648
        %v660 = vmul.f32 %v659, %v657
        %v661 = vmul.f32 %v659, %v658
        %v662 = vld [vmem:[%s363] sm:$0xff]
        %v663 = vld [vmem:[%s363 + $0x8] sm:$0xff]
        %v664 = vadd.f32 %v660, %v662
        %v665 = vadd.f32 %v661, %v663
        %666 = vst.msk [vmem:[%s371] sm:$0xff] %vm494, %v664
        %667 = vst.msk [vmem:[%s371 + $0x8] sm:$0xff] %vm494, %v665
      $region48: #{gfapm_forward.3} parent=39 // pred_fallthru
        _
      %p668 = scmp.lt.s32.totalorder %s22, 1
      %s669 = scalar_select %p668, %s22, 1
      %p670 = scmp.lt.s32.totalorder %s23, 0
      %s671 = scalar_select %p670, %s23, 0
      %s672 = smul.addr %s669, 2
      %s673 = sadd.s32 %s671, %s672
      %s674 = smul.addr %s673, 8
      %s675 = scalar_lea.vmem %s5, %s674
      // Predicated region
      $region49: #{gfapm_forward.3} parent=39 // pred_check
        %p676 = pneg %p189
      $region50: #{gfapm_forward.3} parent=39 // pred_check_branch
        %678 = sbr.rel (%p676) target = $region52
      $region51: #{gfapm_forward.3} parent=39 // pred_region
        _
      $region52: #{gfapm_forward.3} parent=39 // pred_fallthru
        _
    $region40: #{gfapm_forward.3} parent=5 // pred_fallthru
      _
    %p679 = scmp.le.s32.totalorder 2, %s12
    // Predicated region
    $region53: #{gfapm_forward.3} parent=5 // pred_check
      %p680 = pneg %p679
    $region54: #{gfapm_forward.3} parent=5 // pred_check_branch
      %682 = sbr.rel (%p680) target = $region56
    $region55: #{gfapm_forward.3} parent=5 // pred_region
      %s683 = ssub.s32 %s12, 2
      // Predicated region
      $region57: #{gfapm_forward.3} parent=55 // pred_check
        %p684 = pneg %p195
      $region58: #{gfapm_forward.3} parent=55 // pred_check_branch
        %686 = sbr.rel (%p684) target = $region60
      $region59: #{gfapm_forward.3} parent=55 // pred_region
        %p687 = scmp.lt.s32.totalorder %s25, 1
        %s688 = scalar_select %p687, %s25, 1
        %p689 = scmp.lt.s32.totalorder %s26, 0
        %s690 = scalar_select %p689, %s26, 0
        %s691 = smul.addr %s688, 2
        %s692 = sadd.s32 %s690, %s691
        %s693 = smul.addr %s692, 8
        %s694 = scalar_lea.vmem %s5, %s693
      $region60: #{gfapm_forward.3} parent=55 // pred_fallthru
        _
    $region56: #{gfapm_forward.3} parent=5 // pred_fallthru
      _
  $region6: #{gfapm_forward.3} parent=0 // loop_footer
    %s16 = sadd.s32 1, %s12
  $region7: #{gfapm_forward.3} parent=0 // loop_footer_branch
    %11 = sbr.rel target = $region3
  $region8: #{gfapm_forward.3} parent=0 // loop_exit
    _

// kernel: gfapm_forward.2
$region0: #{gfapm_forward.2}
  #allocation0 [shape = 'u32[]', space=smem, size = 0x4, offset = 0x4, fixed_abs, tag = 'smem constant byte address 0x4 - core index']
  #allocation1 [shape = 'u32[144,128]{1,0:T(1,128)}', space=vmem, size = 0x12000, scoped, tag = 'internal scratch']
  %s0 = inlined_call_operand.vmem [shape: f32[2,16,64], index: 0, kind: input, shape index: {}]
  %s1 = inlined_call_operand.vmem [shape: f32[2,16,64], index: 1, kind: input, shape index: {}]
  %s2 = inlined_call_operand.vmem [shape: f32[2,16,64], index: 2, kind: input, shape index: {}]
  %s3 = inlined_call_operand.vmem [shape: f32[16,4], index: 3, kind: input, shape index: {}]
  %s4 = inlined_call_operand.vmem [shape: f32[1,4], index: 4, kind: input, shape index: {}]
  %s5 = inlined_call_operand.vmem [shape: f32[16,4], index: 5, kind: input, shape index: {}]
  %s6 = inlined_call_operand.vmem [shape: f32[1,4], index: 6, kind: input, shape index: {}]
  %s7 = inlined_call_operand.vmem [shape: f32[16,16], index: 7, kind: input, shape index: {}]
  %s8 = inlined_call_operand.vmem [shape: f32[1,16], index: 8, kind: input, shape index: {}]
  %s9 = inlined_call_operand.vmem [shape: bf16[2,64,4], index: 9, kind: output, shape index: {0}]
  %s10 = inlined_call_operand.vmem [shape: bf16[2,64,4], index: 10, kind: output, shape index: {1}]
  %s11 = inlined_call_operand.vmem [shape: bf16[2,64,16], index: 11, kind: output, shape index: {2}]
  %12 = xla_tuple %s9, %s10, %s11
  %s13 = sld [smem:[#allocation0]]
  $region85: #{gfapm_forward.2} parent=0
    _
  %s15 = ssub.s32 1, %s13
  %s16 = scalar_select 0, %s15, %s13
  loop: start=0, step=1, limit=4
  $region2: #{gfapm_forward.2} parent=0 // loop_pre_header
    _
  $region3: #{gfapm_forward.2} parent=0 // loop_header
    %s18 = sphi 0, %s22
    %p19 = scmp.ge.s32.totalorder %s18, 4
    %s25 = sphi 0, %s37
    %s26 = sphi 0, %s33
    %s27 = sphi 0, %s25
    %s28 = sphi 0, %s26
    %s29 = sphi 0, %s27
    %s30 = sphi 0, %s28
    %s42 = sphi 0, %s44
    %s45 = sphi 0, %s42
    %s46 = sphi 0, %s45
    %s62 = sphi 0, %s46
    %s70 = sphi 0, %s72
    %s73 = sphi 0, %s70
    %s74 = sphi 0, %s73
    %s90 = sphi 0, %s74
    %s98 = sphi 0, %s100
    %s101 = sphi 0, %s98
    %s102 = sphi 0, %s101
    %s118 = sphi 0, %s102
    %s122 = sphi 0, %s122
    %s124 = sphi 0, %s122
    %s125 = sphi 0, %s124
    %s139 = sphi 0, %s125
    %s143 = sphi 0, %s143
    %s145 = sphi 0, %s143
    %s146 = sphi 0, %s145
    %s160 = sphi 0, %s146
    %s164 = sphi 0, %s164
    %s166 = sphi 0, %s164
    %s167 = sphi 0, %s166
    %s181 = sphi 0, %s167
    %s185 = sphi 0, %s185
    %s187 = sphi 0, %s185
    %s188 = sphi 0, %s187
    %s202 = sphi 0, %s188
    %s206 = sphi 0, %s206
    %s208 = sphi 0, %s206
    %s209 = sphi 0, %s208
    %s223 = sphi 0, %s209
    %s227 = sphi 0, %s227
    %s229 = sphi 0, %s227
    %s230 = sphi 0, %s229
    %s244 = sphi 0, %s230
    %s252 = sphi 0, %s254
    %s255 = sphi 0, %s252
    %s256 = sphi 0, %s255
    %s272 = sphi 0, %s256
    %s280 = sphi 0, %s282
    %s283 = sphi 0, %s280
    %s284 = sphi 0, %s283
    %s300 = sphi 0, %s284
    %s308 = sphi 0, %s310
    %s311 = sphi 0, %s308
    %s312 = sphi 0, %s311
    %s328 = sphi 0, %s312
  $region4: #{gfapm_forward.2} parent=0 // loop_header_branch
    %21 = sbr.rel (%p19) target = $region8
  $region5: #{gfapm_forward.2} parent=0 // loop_body
    %s23 = ssub.s32 %s18, 1
    %s24 = ssub.s32 %s18, 2
    %s31 = sadd.s32 1, %s26
    %p32 = scmp.ge.s32.totalorder %s31, 1
    %s33 = scalar_select %p32, 0, %s31
    %s34 = sadd.s32 1, %s25
    %s35 = scalar_select %p32, %s34, %s25
    %p36 = scmp.ge.s32.totalorder %s35, 2
    %s37 = scalar_select %p36, 0, %s35
    %s38 = ssub.s32 %s25, %s37
    %s39 = ssub.s32 %s26, %s33
    %s40 = sor.u32 %s38, %s39
    %p41 = scmp.eq.s32.totalorder %s40, 0
    %s43 = sadd.s32 %s42, 1
    %s44 = scalar_select %p41, %s42, %s43
    %p47 = pneg %p41
    %p48 = scmp.eq.s32.totalorder %s18, 1
    %p49 = por %p47, %p48
    %p50 = scmp.ne.s32.totalorder %s42, %s45
    %p51 = scmp.eq.s32.totalorder %s18, 0
    %p52 = por %p50, %p51
    %p53 = scmp.ne.s32.totalorder %s42, %s45
    %p54 = scmp.eq.s32.totalorder %s23, 1
    %p55 = por %p53, %p54
    %p56 = scmp.ne.s32.totalorder %s45, %s46
    %p57 = scmp.eq.s32.totalorder %s23, 0
    %p58 = por %p56, %p57
    %p59 = scmp.ne.s32.totalorder %s45, %s46
    %p60 = scmp.eq.s32.totalorder %s24, 1
    %p61 = por %p59, %p60
    %p63 = scmp.ne.s32.totalorder %s46, %s62
    %p64 = scmp.eq.s32.totalorder %s24, 0
    %p65 = por %p63, %p64
    %s66 = ssub.s32 %s25, %s37
    %s67 = ssub.s32 %s26, %s33
    %s68 = sor.u32 %s66, %s67
    %p69 = scmp.eq.s32.totalorder %s68, 0
    %s71 = sadd.s32 %s70, 1
    %s72 = scalar_select %p69, %s70, %s71
    %p75 = pneg %p69
    %p76 = scmp.eq.s32.totalorder %s18, 1
    %p77 = por %p75, %p76
    %p78 = scmp.ne.s32.totalorder %s70, %s73
    %p79 = scmp.eq.s32.totalorder %s18, 0
    %p80 = por %p78, %p79
    %p81 = scmp.ne.s32.totalorder %s70, %s73
    %p82 = scmp.eq.s32.totalorder %s23, 1
    %p83 = por %p81, %p82
    %p84 = scmp.ne.s32.totalorder %s73, %s74
    %p85 = scmp.eq.s32.totalorder %s23, 0
    %p86 = por %p84, %p85
    %p87 = scmp.ne.s32.totalorder %s73, %s74
    %p88 = scmp.eq.s32.totalorder %s24, 1
    %p89 = por %p87, %p88
    %p91 = scmp.ne.s32.totalorder %s74, %s90
    %p92 = scmp.eq.s32.totalorder %s24, 0
    %p93 = por %p91, %p92
    %s94 = ssub.s32 %s25, %s37
    %s95 = ssub.s32 %s26, %s33
    %s96 = sor.u32 %s94, %s95
    %p97 = scmp.eq.s32.totalorder %s96, 0
    %s99 = sadd.s32 %s98, 1
    %s100 = scalar_select %p97, %s98, %s99
    %p103 = pneg %p97
    %p104 = scmp.eq.s32.totalorder %s18, 1
    %p105 = por %p103, %p104
    %p106 = scmp.ne.s32.totalorder %s98, %s101
    %p107 = scmp.eq.s32.totalorder %s18, 0
    %p108 = por %p106, %p107
    %p109 = scmp.ne.s32.totalorder %s98, %s101
    %p110 = scmp.eq.s32.totalorder %s23, 1
    %p111 = por %p109, %p110
    %p112 = scmp.ne.s32.totalorder %s101, %s102
    %p113 = scmp.eq.s32.totalorder %s23, 0
    %p114 = por %p112, %p113
    %p115 = scmp.ne.s32.totalorder %s101, %s102
    %p116 = scmp.eq.s32.totalorder %s24, 1
    %p117 = por %p115, %p116
    %p119 = scmp.ne.s32.totalorder %s102, %s118
    %p120 = scmp.eq.s32.totalorder %s24, 0
    %p121 = por %p119, %p120
    %s123 = sadd.s32 %s122, 1
    %p126 = scmp.eq.s32.totalorder %s18, 1
    %p127 = scmp.ne.s32.totalorder %s122, %s124
    %p128 = scmp.eq.s32.totalorder %s18, 0
    %p129 = por %p127, %p128
    %p130 = scmp.ne.s32.totalorder %s122, %s124
    %p131 = scmp.eq.s32.totalorder %s23, 1
    %p132 = por %p130, %p131
    %p133 = scmp.ne.s32.totalorder %s124, %s125
    %p134 = scmp.eq.s32.totalorder %s23, 0
    %p135 = por %p133, %p134
    %p136 = scmp.ne.s32.totalorder %s124, %s125
    %p137 = scmp.eq.s32.totalorder %s24, 1
    %p138 = por %p136, %p137
    %p140 = scmp.ne.s32.totalorder %s125, %s139
    %p141 = scmp.eq.s32.totalorder %s24, 0
    %p142 = por %p140, %p141
    %s144 = sadd.s32 %s143, 1
    %p147 = scmp.eq.s32.totalorder %s18, 1
    %p148 = scmp.ne.s32.totalorder %s143, %s145
    %p149 = scmp.eq.s32.totalorder %s18, 0
    %p150 = por %p148, %p149
    %p151 = scmp.ne.s32.totalorder %s143, %s145
    %p152 = scmp.eq.s32.totalorder %s23, 1
    %p153 = por %p151, %p152
    %p154 = scmp.ne.s32.totalorder %s145, %s146
    %p155 = scmp.eq.s32.totalorder %s23, 0
    %p156 = por %p154, %p155
    %p157 = scmp.ne.s32.totalorder %s145, %s146
    %p158 = scmp.eq.s32.totalorder %s24, 1
    %p159 = por %p157, %p158
    %p161 = scmp.ne.s32.totalorder %s146, %s160
    %p162 = scmp.eq.s32.totalorder %s24, 0
    %p163 = por %p161, %p162
    %s165 = sadd.s32 %s164, 1
    %p168 = scmp.eq.s32.totalorder %s18, 1
    %p169 = scmp.ne.s32.totalorder %s164, %s166
    %p170 = scmp.eq.s32.totalorder %s18, 0
    %p171 = por %p169, %p170
    %p172 = scmp.ne.s32.totalorder %s164, %s166
    %p173 = scmp.eq.s32.totalorder %s23, 1
    %p174 = por %p172, %p173
    %p175 = scmp.ne.s32.totalorder %s166, %s167
    %p176 = scmp.eq.s32.totalorder %s23, 0
    %p177 = por %p175, %p176
    %p178 = scmp.ne.s32.totalorder %s166, %s167
    %p179 = scmp.eq.s32.totalorder %s24, 1
    %p180 = por %p178, %p179
    %p182 = scmp.ne.s32.totalorder %s167, %s181
    %p183 = scmp.eq.s32.totalorder %s24, 0
    %p184 = por %p182, %p183
    %s186 = sadd.s32 %s185, 1
    %p189 = scmp.eq.s32.totalorder %s18, 1
    %p190 = scmp.ne.s32.totalorder %s185, %s187
    %p191 = scmp.eq.s32.totalorder %s18, 0
    %p192 = por %p190, %p191
    %p193 = scmp.ne.s32.totalorder %s185, %s187
    %p194 = scmp.eq.s32.totalorder %s23, 1
    %p195 = por %p193, %p194
    %p196 = scmp.ne.s32.totalorder %s187, %s188
    %p197 = scmp.eq.s32.totalorder %s23, 0
    %p198 = por %p196, %p197
    %p199 = scmp.ne.s32.totalorder %s187, %s188
    %p200 = scmp.eq.s32.totalorder %s24, 1
    %p201 = por %p199, %p200
    %p203 = scmp.ne.s32.totalorder %s188, %s202
    %p204 = scmp.eq.s32.totalorder %s24, 0
    %p205 = por %p203, %p204
    %s207 = sadd.s32 %s206, 1
    %p210 = scmp.eq.s32.totalorder %s18, 1
    %p211 = scmp.ne.s32.totalorder %s206, %s208
    %p212 = scmp.eq.s32.totalorder %s18, 0
    %p213 = por %p211, %p212
    %p214 = scmp.ne.s32.totalorder %s206, %s208
    %p215 = scmp.eq.s32.totalorder %s23, 1
    %p216 = por %p214, %p215
    %p217 = scmp.ne.s32.totalorder %s208, %s209
    %p218 = scmp.eq.s32.totalorder %s23, 0
    %p219 = por %p217, %p218
    %p220 = scmp.ne.s32.totalorder %s208, %s209
    %p221 = scmp.eq.s32.totalorder %s24, 1
    %p222 = por %p220, %p221
    %p224 = scmp.ne.s32.totalorder %s209, %s223
    %p225 = scmp.eq.s32.totalorder %s24, 0
    %p226 = por %p224, %p225
    %s228 = sadd.s32 %s227, 1
    %p231 = scmp.eq.s32.totalorder %s18, 1
    %p232 = scmp.ne.s32.totalorder %s227, %s229
    %p233 = scmp.eq.s32.totalorder %s18, 0
    %p234 = por %p232, %p233
    %p235 = scmp.ne.s32.totalorder %s227, %s229
    %p236 = scmp.eq.s32.totalorder %s23, 1
    %p237 = por %p235, %p236
    %p238 = scmp.ne.s32.totalorder %s229, %s230
    %p239 = scmp.eq.s32.totalorder %s23, 0
    %p240 = por %p238, %p239
    %p241 = scmp.ne.s32.totalorder %s229, %s230
    %p242 = scmp.eq.s32.totalorder %s24, 1
    %p243 = por %p241, %p242
    %p245 = scmp.ne.s32.totalorder %s230, %s244
    %p246 = scmp.eq.s32.totalorder %s24, 0
    %p247 = por %p245, %p246
    %s248 = ssub.s32 %s25, %s37
    %s249 = ssub.s32 %s26, %s33
    %s250 = sor.u32 %s248, %s249
    %p251 = scmp.eq.s32.totalorder %s250, 0
    %s253 = sadd.s32 %s252, 1
    %s254 = scalar_select %p251, %s252, %s253
    %p257 = pneg %p251
    %p258 = scmp.eq.s32.totalorder %s18, 1
    %p259 = por %p257, %p258
    %p260 = scmp.ne.s32.totalorder %s252, %s255
    %p261 = scmp.eq.s32.totalorder %s18, 0
    %p262 = por %p260, %p261
    %p263 = scmp.ne.s32.totalorder %s252, %s255
    %p264 = scmp.eq.s32.totalorder %s23, 1
    %p265 = por %p263, %p264
    %p266 = scmp.ne.s32.totalorder %s255, %s256
    %p267 = scmp.eq.s32.totalorder %s23, 0
    %p268 = por %p266, %p267
    %p269 = scmp.ne.s32.totalorder %s255, %s256
    %p270 = scmp.eq.s32.totalorder %s24, 1
    %p271 = por %p269, %p270
    %p273 = scmp.ne.s32.totalorder %s256, %s272
    %p274 = scmp.eq.s32.totalorder %s24, 0
    %p275 = por %p273, %p274
    %s276 = ssub.s32 %s25, %s37
    %s277 = ssub.s32 %s26, %s33
    %s278 = sor.u32 %s276, %s277
    %p279 = scmp.eq.s32.totalorder %s278, 0
    %s281 = sadd.s32 %s280, 1
    %s282 = scalar_select %p279, %s280, %s281
    %p285 = pneg %p279
    %p286 = scmp.eq.s32.totalorder %s18, 1
    %p287 = por %p285, %p286
    %p288 = scmp.ne.s32.totalorder %s280, %s283
    %p289 = scmp.eq.s32.totalorder %s18, 0
    %p290 = por %p288, %p289
    %p291 = scmp.ne.s32.totalorder %s280, %s283
    %p292 = scmp.eq.s32.totalorder %s23, 1
    %p293 = por %p291, %p292
    %p294 = scmp.ne.s32.totalorder %s283, %s284
    %p295 = scmp.eq.s32.totalorder %s23, 0
    %p296 = por %p294, %p295
    %p297 = scmp.ne.s32.totalorder %s283, %s284
    %p298 = scmp.eq.s32.totalorder %s24, 1
    %p299 = por %p297, %p298
    %p301 = scmp.ne.s32.totalorder %s284, %s300
    %p302 = scmp.eq.s32.totalorder %s24, 0
    %p303 = por %p301, %p302
    %s304 = ssub.s32 %s25, %s37
    %s305 = ssub.s32 %s26, %s33
    %s306 = sor.u32 %s304, %s305
    %p307 = scmp.eq.s32.totalorder %s306, 0
    %s309 = sadd.s32 %s308, 1
    %s310 = scalar_select %p307, %s308, %s309
    %p313 = pneg %p307
    %p314 = scmp.eq.s32.totalorder %s18, 1
    %p315 = por %p313, %p314
    %p316 = scmp.ne.s32.totalorder %s308, %s311
    %p317 = scmp.eq.s32.totalorder %s18, 0
    %p318 = por %p316, %p317
    %p319 = scmp.ne.s32.totalorder %s308, %s311
    %p320 = scmp.eq.s32.totalorder %s23, 1
    %p321 = por %p319, %p320
    %p322 = scmp.ne.s32.totalorder %s311, %s312
    %p323 = scmp.eq.s32.totalorder %s23, 0
    %p324 = por %p322, %p323
    %p325 = scmp.ne.s32.totalorder %s311, %s312
    %p326 = scmp.eq.s32.totalorder %s24, 1
    %p327 = por %p325, %p326
    %p329 = scmp.ne.s32.totalorder %s312, %s328
    %p330 = scmp.eq.s32.totalorder %s24, 0
    %p331 = por %p329, %p330
    %p332 = scmp.le.s32.totalorder 1, %s18
    %p333 = scmp.lt.s32.totalorder %s18, 3
    %p334 = pnand %p332, %p333
    %p335 = pneg %p334
    // Predicated region
    $region9: #{gfapm_forward.2} parent=5 // pred_check
      _
    $region10: #{gfapm_forward.2} parent=5 // pred_check_branch
      %337 = sbr.rel (%p334) target = $region12
    $region11: #{gfapm_forward.2} parent=5 // pred_region
      %s338 = ssub.s32 %s18, 1
      // Predicated region
      $region13: #{gfapm_forward.2} parent=11 // pred_check
        %p339 = pneg %p135
      $region14: #{gfapm_forward.2} parent=11 // pred_check_branch
        %341 = sbr.rel (%p339) target = $region16
      $region15: #{gfapm_forward.2} parent=11 // pred_region
        _
      $region16: #{gfapm_forward.2} parent=11 // pred_fallthru
        _
      // Predicated region
      $region17: #{gfapm_forward.2} parent=11 // pred_check
        %p342 = pneg %p156
      $region18: #{gfapm_forward.2} parent=11 // pred_check_branch
        %344 = sbr.rel (%p342) target = $region20
      $region19: #{gfapm_forward.2} parent=11 // pred_region
        _
      $region20: #{gfapm_forward.2} parent=11 // pred_fallthru
        _
      // Predicated region
      $region21: #{gfapm_forward.2} parent=11 // pred_check
        %p345 = pneg %p177
      $region22: #{gfapm_forward.2} parent=11 // pred_check_branch
        %347 = sbr.rel (%p345) target = $region24
      $region23: #{gfapm_forward.2} parent=11 // pred_region
        _
      $region24: #{gfapm_forward.2} parent=11 // pred_fallthru
        _
      // Predicated region
      $region25: #{gfapm_forward.2} parent=11 // pred_check
        %p348 = pneg %p198
      $region26: #{gfapm_forward.2} parent=11 // pred_check_branch
        %350 = sbr.rel (%p348) target = $region28
      $region27: #{gfapm_forward.2} parent=11 // pred_region
        _
      $region28: #{gfapm_forward.2} parent=11 // pred_fallthru
        _
      // Predicated region
      $region29: #{gfapm_forward.2} parent=11 // pred_check
        %p351 = pneg %p219
      $region30: #{gfapm_forward.2} parent=11 // pred_check_branch
        %353 = sbr.rel (%p351) target = $region32
      $region31: #{gfapm_forward.2} parent=11 // pred_region
        _
      $region32: #{gfapm_forward.2} parent=11 // pred_fallthru
        _
      // Predicated region
      $region33: #{gfapm_forward.2} parent=11 // pred_check
        %p354 = pneg %p240
      $region34: #{gfapm_forward.2} parent=11 // pred_check_branch
        %356 = sbr.rel (%p354) target = $region36
      $region35: #{gfapm_forward.2} parent=11 // pred_region
        _
      $region36: #{gfapm_forward.2} parent=11 // pred_fallthru
        _
    $region12: #{gfapm_forward.2} parent=5 // pred_fallthru
      _
    %p357 = scmp.lt.s32.totalorder %s18, 2
    // Predicated region
    $region37: #{gfapm_forward.2} parent=5 // pred_check
      %p358 = pneg %p357
    $region38: #{gfapm_forward.2} parent=5 // pred_check_branch
      %360 = sbr.rel (%p358) target = $region40
    $region39: #{gfapm_forward.2} parent=5 // pred_region
      // Predicated region
      $region41: #{gfapm_forward.2} parent=39 // pred_check
        %p361 = pneg %p52
      $region42: #{gfapm_forward.2} parent=39 // pred_check_branch
        %363 = sbr.rel (%p361) target = $region44
      $region43: #{gfapm_forward.2} parent=39 // pred_region
        %p364 = scmp.lt.s32.totalorder %s25, 1
        %s365 = scalar_select %p364, %s25, 1
        %p366 = scmp.lt.s32.totalorder %s26, 0
        %s367 = scalar_select %p366, %s26, 0
        %s368 = smul.addr %s365, 2
        %s369 = sadd.s32 %s367, %s368
        %s370 = smul.addr %s369, 8
        %s371 = scalar_lea.vmem %s0, %s370
      $region44: #{gfapm_forward.2} parent=39 // pred_fallthru
        _
      // Predicated region
      $region45: #{gfapm_forward.2} parent=39 // pred_check
        %p372 = pneg %p80
      $region46: #{gfapm_forward.2} parent=39 // pred_check_branch
        %374 = sbr.rel (%p372) target = $region48
      $region47: #{gfapm_forward.2} parent=39 // pred_region
        %p375 = scmp.lt.s32.totalorder %s25, 1
        %s376 = scalar_select %p375, %s25, 1
        %p377 = scmp.lt.s32.totalorder %s26, 0
        %s378 = scalar_select %p377, %s26, 0
        %s379 = smul.addr %s376, 2
        %s380 = sadd.s32 %s378, %s379
        %s381 = smul.addr %s380, 8
        %s382 = scalar_lea.vmem %s1, %s381
      $region48: #{gfapm_forward.2} parent=39 // pred_fallthru
        _
      // Predicated region
      $region49: #{gfapm_forward.2} parent=39 // pred_check
        %p383 = pneg %p108
      $region50: #{gfapm_forward.2} parent=39 // pred_check_branch
        %385 = sbr.rel (%p383) target = $region52
      $region51: #{gfapm_forward.2} parent=39 // pred_region
        %p386 = scmp.lt.s32.totalorder %s25, 1
        %s387 = scalar_select %p386, %s25, 1
        %p388 = scmp.lt.s32.totalorder %s26, 0
        %s389 = scalar_select %p388, %s26, 0
        %s390 = smul.addr %s387, 2
        %s391 = sadd.s32 %s389, %s390
        %s392 = smul.addr %s391, 8
        %s393 = scalar_lea.vmem %s2, %s392
      $region52: #{gfapm_forward.2} parent=39 // pred_fallthru
        _
    $region40: #{gfapm_forward.2} parent=5 // pred_fallthru
      _
    %p394 = scmp.le.s32.totalorder 1, %s18
    %p395 = scmp.lt.s32.totalorder %s18, 3
    %p396 = pnand %p394, %p395
    %p397 = pneg %p396
    // Predicated region
    $region53: #{gfapm_forward.2} parent=5 // pred_check
      _
    $region54: #{gfapm_forward.2} parent=5 // pred_check_branch
      %399 = sbr.rel (%p396) target = $region56
    $region55: #{gfapm_forward.2} parent=5 // pred_region
      %s400 = ssub.s32 %s18, 1
      %p401 = scmp.lt.s32.totalorder %s27, 1
      %s402 = scalar_select %p401, %s27, 1
      %p403 = scmp.lt.s32.totalorder %s28, 0
      %s404 = scalar_select %p403, %s28, 0
      %s405 = smul.addr %s402, 2
      %s406 = sadd.s32 %s404, %s405
      %s407 = smul.addr %s406, 8
      %s408 = scalar_lea.vmem %s0, %s407
      %p409 = pneg %p58
      %p410 = pneg %p55
      %p411 = scmp.lt.s32.totalorder %s27, 1
      %s412 = scalar_select %p411, %s27, 1
      %p413 = scmp.lt.s32.totalorder %s28, 0
      %s414 = scalar_select %p413, %s28, 0
      %s415 = smul.addr %s412, 2
      %s416 = sadd.s32 %s414, %s415
      %s417 = smul.addr %s416, 8
      %s418 = scalar_lea.vmem %s1, %s417
      %p419 = pneg %p86
      %p420 = pneg %p83
      %p421 = scmp.lt.s32.totalorder %s27, 1
      %s422 = scalar_select %p421, %s27, 1
      %p423 = scmp.lt.s32.totalorder %s28, 0
      %s424 = scalar_select %p423, %s28, 0
      %s425 = smul.addr %s422, 2
      %s426 = sadd.s32 %s424, %s425
      %s427 = smul.addr %s426, 8
      %s428 = scalar_lea.vmem %s2, %s427
      %p429 = pneg %p114
      %p430 = pneg %p111
      %p431 = pneg %p135
      %p432 = pneg %p132
      %p433 = pneg %p156
      %p434 = pneg %p153
      %p435 = pneg %p177
      %p436 = pneg %p174
      %p437 = pneg %p198
      %p438 = pneg %p195
      %p439 = pneg %p219
      %p440 = pneg %p216
      %p441 = pneg %p240
      %p442 = pneg %p237
      %p443 = pneg %p268
      %p444 = pneg %p265
      %s445 = smul.u32 8, %s28
      %p446 = scmp.lt.s32.totalorder %s27, 1
      %s447 = scalar_select %p446, %s27, 1
      %p448 = scmp.lt.s32.totalorder %s445, 7
      %s449 = scalar_select %p448, %s445, 7
      %s450 = smul.addr %s447, 8
      %s451 = sadd.s32 %s449, %s450
      %s452 = smul.addr %s451, 4
      %s453 = scalar_lea.vmem %s9, %s452
      %p454 = pneg %p296
      %p455 = pneg %p293
      %s456 = smul.u32 8, %s28
      %p457 = scmp.lt.s32.totalorder %s27, 1
      %s458 = scalar_select %p457, %s27, 1
      %p459 = scmp.lt.s32.totalorder %s456, 7
      %s460 = scalar_select %p459, %s456, 7
      %s461 = smul.addr %s458, 8
      %s462 = sadd.s32 %s460, %s461
      %s463 = smul.addr %s462, 4
      %s464 = scalar_lea.vmem %s10, %s463
      %p465 = pneg %p324
      %p466 = pneg %p321
      %s467 = smul.u32 8, %s28
      %p468 = scmp.lt.s32.totalorder %s27, 1
      %s469 = scalar_select %p468, %s27, 1
      %p470 = scmp.lt.s32.totalorder %s467, 7
      %s471 = scalar_select %p470, %s467, 7
      %s472 = smul.addr %s469, 8
      %s473 = sadd.s32 %s471, %s472
      %s474 = smul.addr %s473, 4
      %s475 = scalar_lea.vmem %s11, %s474
      %p476 = scmp.lt.s32.totalorder %s27, 1
      %s477 = scalar_select %p476, %s27, 1
      %p478 = scmp.lt.s32.totalorder %s28, 0
      %s479 = scalar_select %p478, %s28, 0
      %s480 = smul.addr %s477, 2
      %s481 = sadd.s32 %s479, %s480
      %s482 = smul.addr %s481, 8
      %s483 = scalar_lea.vmem %s0, %s482
      %p484 = scmp.lt.s32.totalorder %s27, 1
      %s485 = scalar_select %p484, %s27, 1
      %p486 = scmp.lt.s32.totalorder %s28, 0
      %s487 = scalar_select %p486, %s28, 0
      %s488 = smul.addr %s485, 2
      %s489 = sadd.s32 %s487, %s488
      %s490 = smul.addr %s489, 8
      %s491 = scalar_lea.vmem %s1, %s490
      %p492 = scmp.lt.s32.totalorder %s27, 1
      %s493 = scalar_select %p492, %s27, 1
      %p494 = scmp.lt.s32.totalorder %s28, 0
      %s495 = scalar_select %p494, %s28, 0
      %s496 = smul.addr %s493, 2
      %s497 = sadd.s32 %s495, %s496
      %s498 = smul.addr %s497, 8
      %s499 = scalar_lea.vmem %s2, %s498
      %s500 = smul.u32 8, %s28
      %p501 = scmp.lt.s32.totalorder %s27, 1
      %s502 = scalar_select %p501, %s27, 1
      %p503 = scmp.lt.s32.totalorder %s500, 7
      %s504 = scalar_select %p503, %s500, 7
      %s505 = smul.addr %s502, 8
      %s506 = sadd.s32 %s504, %s505
      %s507 = smul.addr %s506, 4
      %s508 = scalar_lea.vmem %s9, %s507
      %s509 = smul.u32 8, %s28
      %s510 = smul.u32 8, %s28
      %p511 = scmp.lt.s32.totalorder %s27, 1
      %s512 = scalar_select %p511, %s27, 1
      %p513 = scmp.lt.s32.totalorder %s510, 7
      %s514 = scalar_select %p513, %s510, 7
      %s515 = smul.addr %s512, 8
      %s516 = sadd.s32 %s514, %s515
      %s517 = smul.addr %s516, 4
      %s518 = scalar_lea.vmem %s10, %s517
      %s519 = smul.u32 8, %s28
      %s520 = smul.u32 8, %s28
      %p521 = scmp.lt.s32.totalorder %s27, 1
      %s522 = scalar_select %p521, %s27, 1
      %p523 = scmp.lt.s32.totalorder %s520, 7
      %s524 = scalar_select %p523, %s520, 7
      %s525 = smul.addr %s522, 8
      %s526 = sadd.s32 %s524, %s525
      %s527 = smul.addr %s526, 4
      %s528 = scalar_lea.vmem %s11, %s527
      %s529 = smul.u32 8, %s28
      %v530 = vld [vmem:[%s483] sm:$0xff]
      %v531 = vld [vmem:[%s483 + $0x8] sm:$0xff]
      %v532 = vld [vmem:[%s3] sm:$0xff]
      %v533 = vld [vmem:[%s3 + $0x8] sm:$0xff]
      %v534 = vld [vmem:[%s4] sm:$0x1]
      %v536 = vlaneseq
      %v537 = vshrl.u32 %v536, 7
      %v538 = vsub.s32 0, %v537
      %v539 = vrot.slane %v534, %v538
      %541 = vxpose.xlu0.b32.start [1/16] %v530, 128
      %542 = vxpose.xlu0.b32.cont [2/16] %v531, 128
      %543 = vxpose.xlu0.b32.cont [3/16] 0.0, 128
      %544 = vxpose.xlu0.b32.cont [4/16] 0.0, 128
      %545 = vxpose.xlu0.b32.cont [5/16] 0.0, 128
      %546 = vxpose.xlu0.b32.cont [6/16] 0.0, 128
      %547 = vxpose.xlu0.b32.cont [7/16] 0.0, 128
      %548 = vxpose.xlu0.b32.cont [8/16] 0.0, 128
      %549 = vxpose.xlu0.b32.cont [9/16] 0.0, 128
      %550 = vxpose.xlu0.b32.cont [10/16] 0.0, 128
      %551 = vxpose.xlu0.b32.cont [11/16] 0.0, 128
      %552 = vxpose.xlu0.b32.cont [12/16] 0.0, 128
      %553 = vxpose.xlu0.b32.cont [13/16] 0.0, 128
      %554 = vxpose.xlu0.b32.cont [14/16] 0.0, 128
      %555 = vxpose.xlu0.b32.cont [15/16] 0.0, 128
      %556 = vxpose.xlu0.b32.end [16/16] 0.0, 128
      %v557 = vpop.trf.xlu0
      %v558 = vpop.trf.xlu0
      %v559 = vpop.trf.xlu0
      %v560 = vpop.trf.xlu0
      %v561 = vpop.trf.xlu0
      %v562 = vpop.trf.xlu0
      %v563 = vpop.trf.xlu0
      %v564 = vpop.trf.xlu0
      %v565 = vpop.trf.xlu0
      %v566 = vpop.trf.xlu0
      %v567 = vpop.trf.xlu0
      %v568 = vpop.trf.xlu0
      %v569 = vpop.trf.xlu0
      %v570 = vpop.trf.xlu0
      %v571 = vpop.trf.xlu0
      %v572 = vpop.trf.xlu0
      %vm573 = vcmask 130048
      %v575 = vsel %vm573, %v557, 0
      %v578 = vsel %vm573, %v558, 0
      %v581 = vsel %vm573, %v559, 0
      %v584 = vsel %vm573, %v560, 0
      %v587 = vsel %vm573, %v561, 0
      %v590 = vsel %vm573, %v562, 0
      %v593 = vsel %vm573, %v563, 0
      %v596 = vsel %vm573, %v564, 0
      %598 = vmatprep.subr.mxu0 0.0
      %599 = vmatpush1.msra.mxu0 0.0
      %600 = vmatprep.subr.mxu0 0.0
      %601 = vmatpush1.msra.mxu0 0.0
      %602 = vmatprep.subr.mxu0 0.0
      %603 = vmatpush1.msra.mxu0 0.0
      %604 = vmatprep.subr.mxu0 0.0
      %605 = vmatpush1.msra.mxu0 0.0
      %606 = vmatprep.subr.mxu0 0.0
      %607 = vmatpush1.msra.mxu0 0.0
      %608 = vmatprep.subr.mxu0 0.0
      %609 = vmatpush1.msra.mxu0 0.0
      %610 = vmatprep.subr.mxu0 0.0
      %611 = vmatpush1.msra.mxu0 0.0
      %612 = vmatprep.subr.mxu0 0.0
      %613 = vmatpush1.msra.mxu0 0.0
      %614 = vmatprep.subr.mxu0 0.0
      %615 = vmatpush1.msra.mxu0 0.0
      %616 = vmatprep.subr.mxu0 0.0
      %617 = vmatpush1.msra.mxu0 0.0
      %618 = vmatprep.subr.mxu0 0.0
      %619 = vmatpush1.msra.mxu0 0.0
      %620 = vmatprep.subr.mxu0 0.0
      %621 = vmatpush1.msra.mxu0 0.0
      %622 = vmatprep.subr.mxu0 0.0
      %623 = vmatpush1.msra.mxu0 0.0
      %624 = vmatprep.subr.mxu0 0.0
      %625 = vmatpush1.msra.mxu0 0.0
      %626 = vmatprep.subr.mxu0 0.0
      %627 = vmatpush1.msra.mxu0 %v533
      %628 = vmatprep.subr.mxu0 0.0
      %629 = vmatpush1.msra.mxu0 %v532
      %630 = vmatprep.subr.mxu0 0.0
      %631 = vmatpush2.msra.mxu0 0.0
      %632 = vmatprep.subr.mxu0 0.0
      %633 = vmatpush2.msra.mxu0 0.0
      %634 = vmatprep.subr.mxu0 0.0
      %635 = vmatpush2.msra.mxu0 0.0
      %636 = vmatprep.subr.mxu0 0.0
      %637 = vmatpush2.msra.mxu0 0.0
      %638 = vmatprep.subr.mxu0 0.0
      %639 = vmatpush2.msra.mxu0 0.0
      %640 = vmatprep.subr.mxu0 0.0
      %641 = vmatpush2.msra.mxu0 0.0
      %642 = vmatprep.subr.mxu0 0.0
      %643 = vmatpush2.msra.mxu0 0.0
      %644 = vmatprep.subr.mxu0 0.0
      %645 = vmatpush2.msra.mxu0 0.0
      %646 = vmatprep.subr.mxu0 0.0
      %647 = vmatpush2.msra.mxu0 0.0
      %648 = vmatprep.subr.mxu0 0.0
      %649 = vmatpush2.msra.mxu0 0.0
      %650 = vmatprep.subr.mxu0 0.0
      %651 = vmatpush2.msra.mxu0 0.0
      %652 = vmatprep.subr.mxu0 0.0
      %653 = vmatpush2.msra.mxu0 0.0
      %654 = vmatprep.subr.mxu0 0.0
      %655 = vmatpush2.msra.mxu0 0.0
      %656 = vmatprep.subr.mxu0 0.0
      %657 = vmatpush2.msra.mxu0 0.0
      %658 = vmatprep.subr.mxu0 0.0
      %659 = vmatpush2.msra.mxu0 0.0
      %660 = vmatprep.subr.mxu0 0.0
      %661 = vmatpush2.msra.mxu0 0.0
      %662 = vmatprep.mubr.f32.mxu0 0.0
      %663 = vmatmul.mubr.f32.gmra.mxu0 %v575
      %v664 = vpop.f32.mrf.mxu0
      %v665 = vadd.f32 %v539, %v664
      %v666 = vpop.f32.mrf.mxu0
      %667 = vmatprep.mubr.f32.mxu0 0.0
      %668 = vmatmul.mubr.f32.gmra.mxu0 %v578
      %v669 = vpop.f32.mrf.mxu0
      %v670 = vadd.f32 %v539, %v669
      %v671 = vpop.f32.mrf.mxu0
      %672 = vmatprep.mubr.f32.mxu0 0.0
      %673 = vmatmul.mubr.f32.gmra.mxu0 %v581
      %v674 = vpop.f32.mrf.mxu0
      %v675 = vadd.f32 %v539, %v674
      %v676 = vpop.f32.mrf.mxu0
      %677 = vmatprep.mubr.f32.mxu0 0.0
      %678 = vmatmul.mubr.f32.gmra.mxu0 %v584
      %v679 = vpop.f32.mrf.mxu0
      %v680 = vadd.f32 %v539, %v679
      %v681 = vpop.f32.mrf.mxu0
      %682 = vmatprep.mubr.f32.mxu0 0.0
      %683 = vmatmul.mubr.f32.gmra.mxu0 %v587
      %v684 = vpop.f32.mrf.mxu0
      %v685 = vadd.f32 %v539, %v684
      %v686 = vpop.f32.mrf.mxu0
      %687 = vmatprep.mubr.f32.mxu0 0.0
      %688 = vmatmul.mubr.f32.gmra.mxu0 %v590
      %v689 = vpop.f32.mrf.mxu0
      %v690 = vadd.f32 %v539, %v689
      %v691 = vpop.f32.mrf.mxu0
      %692 = vmatprep.mubr.f32.mxu0 0.0
      %693 = vmatmul.mubr.f32.gmra.mxu0 %v593
      %v694 = vpop.f32.mrf.mxu0
      %v695 = vadd.f32 %v539, %v694
      %v696 = vpop.f32.mrf.mxu0
      %697 = vmatprep.mubr.f32.mxu0 0.0
      %698 = vmatmul.mubr.f32.gmra.mxu0 %v596
      %v699 = vpop.f32.mrf.mxu0
      %v700 = vadd.f32 %v539, %v699
      %v701 = vpop.f32.mrf.mxu0
      %702 = vdwg.mxu0
      %v703 = vmax.f32 %v665, 0.0
      %v704 = vmax.f32 %v670, 0.0
      %v705 = vmax.f32 %v675, 0.0
      %v706 = vmax.f32 %v680, 0.0
      %v707 = vmax.f32 %v685, 0.0
      %v708 = vmax.f32 %v690, 0.0
      %v709 = vmax.f32 %v695, 0.0
      %v710 = vmax.f32 %v700, 0.0
      %v711 = vpack.c.bf16 %v704, %v703
      %v712 = vpack.c.bf16 %v706, %v705
      %v713 = vpack.c.bf16 %v708, %v707
      %v714 = vpack.c.bf16 %v710, %v709
      %v719 = vunpack.c.l.b16 %v711
      %v720 = vunpack.c.h.b16 %v711
      %v721 = vunpack.c.l.b16 %v712
      %v722 = vunpack.c.h.b16 %v712
      %v723 = vunpack.c.l.b16 %v713
      %v724 = vunpack.c.h.b16 %v713
      %v725 = vunpack.c.l.b16 %v714
      %v726 = vunpack.c.h.b16 %v714
      %v727 = vpack.c.b16 %v719, %v719
      %v728 = vpack.c.b16 %v720, %v720
      %v729 = vpack.c.b16 %v721, %v721
      %v730 = vpack.c.b16 %v722, %v722
      %v731 = vpack.c.b16 %v723, %v723
      %v732 = vpack.c.b16 %v724, %v724
      %v733 = vpack.c.b16 %v725, %v725
      %v734 = vpack.c.b16 %v726, %v726
      %vm743 = vcmask 27648
      %744 = vst.msk [vmem:[%s508] sm:$0xf] %vm743, %v727
      %745 = vst.msk [vmem:[%s508 + $0x4] sm:$0xf] %vm743, %v728
      %746 = vst.msk [vmem:[%s508 + $0x8] sm:$0xf] %vm743, %v729
      %747 = vst.msk [vmem:[%s508 + $0xc] sm:$0xf] %vm743, %v730
      %748 = vst.msk [vmem:[%s508 + $0x10] sm:$0xf] %vm743, %v731
      %749 = vst.msk [vmem:[%s508 + $0x14] sm:$0xf] %vm743, %v732
      %750 = vst.msk [vmem:[%s508 + $0x18] sm:$0xf] %vm743, %v733
      %751 = vst.msk [vmem:[%s508 + $0x1c] sm:$0xf] %vm743, %v734
      %v752 = vld [vmem:[%s491] sm:$0xff]
      %v753 = vld [vmem:[%s491 + $0x8] sm:$0xff]
      %v754 = vld [vmem:[%s5] sm:$0xff]
      %v755 = vld [vmem:[%s5 + $0x8] sm:$0xff]
      %v756 = vld [vmem:[%s6] sm:$0x1]
      %v758 = vlaneseq
      %v759 = vshrl.u32 %v758, 7
      %v760 = vsub.s32 0, %v759
      %v761 = vrot.slane %v756, %v760
      %763 = vxpose.xlu0.b32.start [1/16] %v752, 128
      %764 = vxpose.xlu0.b32.cont [2/16] %v753, 128
      %765 = vxpose.xlu0.b32.cont [3/16] 0.0, 128
      %766 = vxpose.xlu0.b32.cont [4/16] 0.0, 128
      %767 = vxpose.xlu0.b32.cont [5/16] 0.0, 128
      %768 = vxpose.xlu0.b32.cont [6/16] 0.0, 128
      %769 = vxpose.xlu0.b32.cont [7/16] 0.0, 128
      %770 = vxpose.xlu0.b32.cont [8/16] 0.0, 128
      %771 = vxpose.xlu0.b32.cont [9/16] 0.0, 128
      %772 = vxpose.xlu0.b32.cont [10/16] 0.0, 128
      %773 = vxpose.xlu0.b32.cont [11/16] 0.0, 128
      %774 = vxpose.xlu0.b32.cont [12/16] 0.0, 128
      %775 = vxpose.xlu0.b32.cont [13/16] 0.0, 128
      %776 = vxpose.xlu0.b32.cont [14/16] 0.0, 128
      %777 = vxpose.xlu0.b32.cont [15/16] 0.0, 128
      %778 = vxpose.xlu0.b32.end [16/16] 0.0, 128
      %v779 = vpop.trf.xlu0
      %v780 = vpop.trf.xlu0
      %v781 = vpop.trf.xlu0
      %v782 = vpop.trf.xlu0
      %v783 = vpop.trf.xlu0
      %v784 = vpop.trf.xlu0
      %v785 = vpop.trf.xlu0
      %v786 = vpop.trf.xlu0
      %v787 = vpop.trf.xlu0
      %v788 = vpop.trf.xlu0
      %v789 = vpop.trf.xlu0
      %v790 = vpop.trf.xlu0
      %v791 = vpop.trf.xlu0
      %v792 = vpop.trf.xlu0
      %v793 = vpop.trf.xlu0
      %v794 = vpop.trf.xlu0
      %v796 = vsel %vm573, %v779, 0
      %v799 = vsel %vm573, %v780, 0
      %v802 = vsel %vm573, %v781, 0
      %v805 = vsel %vm573, %v782, 0
      %v808 = vsel %vm573, %v783, 0
      %v811 = vsel %vm573, %v784, 0
      %v814 = vsel %vm573, %v785, 0
      %v817 = vsel %vm573, %v786, 0
      %819 = vmatprep.subr.mxu0 0.0
      %820 = vmatpush1.msra.mxu0 0.0
      %821 = vmatprep.subr.mxu0 0.0
      %822 = vmatpush1.msra.mxu0 0.0
      %823 = vmatprep.subr.mxu0 0.0
      %824 = vmatpush1.msra.mxu0 0.0
      %825 = vmatprep.subr.mxu0 0.0
      %826 = vmatpush1.msra.mxu0 0.0
      %827 = vmatprep.subr.mxu0 0.0
      %828 = vmatpush1.msra.mxu0 0.0
      %829 = vmatprep.subr.mxu0 0.0
      %830 = vmatpush1.msra.mxu0 0.0
      %831 = vmatprep.subr.mxu0 0.0
      %832 = vmatpush1.msra.mxu0 0.0
      %833 = vmatprep.subr.mxu0 0.0
      %834 = vmatpush1.msra.mxu0 0.0
      %835 = vmatprep.subr.mxu0 0.0
      %836 = vmatpush1.msra.mxu0 0.0
      %837 = vmatprep.subr.mxu0 0.0
      %838 = vmatpush1.msra.mxu0 0.0
      %839 = vmatprep.subr.mxu0 0.0
      %840 = vmatpush1.msra.mxu0 0.0
      %841 = vmatprep.subr.mxu0 0.0
      %842 = vmatpush1.msra.mxu0 0.0
      %843 = vmatprep.subr.mxu0 0.0
      %844 = vmatpush1.msra.mxu0 0.0
      %845 = vmatprep.subr.mxu0 0.0
      %846 = vmatpush1.msra.mxu0 0.0
      %847 = vmatprep.subr.mxu0 0.0
      %848 = vmatpush1.msra.mxu0 %v755
      %849 = vmatprep.subr.mxu0 0.0
      %850 = vmatpush1.msra.mxu0 %v754
      %851 = vmatprep.subr.mxu0 0.0
      %852 = vmatpush2.msra.mxu0 0.0
      %853 = vmatprep.subr.mxu0 0.0
      %854 = vmatpush2.msra.mxu0 0.0
      %855 = vmatprep.subr.mxu0 0.0
      %856 = vmatpush2.msra.mxu0 0.0
      %857 = vmatprep.subr.mxu0 0.0
      %858 = vmatpush2.msra.mxu0 0.0
      %859 = vmatprep.subr.mxu0 0.0
      %860 = vmatpush2.msra.mxu0 0.0
      %861 = vmatprep.subr.mxu0 0.0
      %862 = vmatpush2.msra.mxu0 0.0
      %863 = vmatprep.subr.mxu0 0.0
      %864 = vmatpush2.msra.mxu0 0.0
      %865 = vmatprep.subr.mxu0 0.0
      %866 = vmatpush2.msra.mxu0 0.0
      %867 = vmatprep.subr.mxu0 0.0
      %868 = vmatpush2.msra.mxu0 0.0
      %869 = vmatprep.subr.mxu0 0.0
      %870 = vmatpush2.msra.mxu0 0.0
      %871 = vmatprep.subr.mxu0 0.0
      %872 = vmatpush2.msra.mxu0 0.0
      %873 = vmatprep.subr.mxu0 0.0
      %874 = vmatpush2.msra.mxu0 0.0
      %875 = vmatprep.subr.mxu0 0.0
      %876 = vmatpush2.msra.mxu0 0.0
      %877 = vmatprep.subr.mxu0 0.0
      %878 = vmatpush2.msra.mxu0 0.0
      %879 = vmatprep.subr.mxu0 0.0
      %880 = vmatpush2.msra.mxu0 0.0
      %881 = vmatprep.subr.mxu0 0.0
      %882 = vmatpush2.msra.mxu0 0.0
      %883 = vmatprep.mubr.f32.mxu0 0.0
      %884 = vmatmul.mubr.f32.gmra.mxu0 %v796
      %v885 = vpop.f32.mrf.mxu0
      %v886 = vadd.f32 %v761, %v885
      %v887 = vpop.f32.mrf.mxu0
      %888 = vmatprep.mubr.f32.mxu0 0.0
      %889 = vmatmul.mubr.f32.gmra.mxu0 %v799
      %v890 = vpop.f32.mrf.mxu0
      %v891 = vadd.f32 %v761, %v890
      %v892 = vpop.f32.mrf.mxu0
      %893 = vmatprep.mubr.f32.mxu0 0.0
      %894 = vmatmul.mubr.f32.gmra.mxu0 %v802
      %v895 = vpop.f32.mrf.mxu0
      %v896 = vadd.f32 %v761, %v895
      %v897 = vpop.f32.mrf.mxu0
      %898 = vmatprep.mubr.f32.mxu0 0.0
      %899 = vmatmul.mubr.f32.gmra.mxu0 %v805
      %v900 = vpop.f32.mrf.mxu0
      %v901 = vadd.f32 %v761, %v900
      %v902 = vpop.f32.mrf.mxu0
      %903 = vmatprep.mubr.f32.mxu0 0.0
      %904 = vmatmul.mubr.f32.gmra.mxu0 %v808
      %v905 = vpop.f32.mrf.mxu0
      %v906 = vadd.f32 %v761, %v905
      %v907 = vpop.f32.mrf.mxu0
      %908 = vmatprep.mubr.f32.mxu0 0.0
      %909 = vmatmul.mubr.f32.gmra.mxu0 %v811
      %v910 = vpop.f32.mrf.mxu0
      %v911 = vadd.f32 %v761, %v910
      %v912 = vpop.f32.mrf.mxu0
      %913 = vmatprep.mubr.f32.mxu0 0.0
      %914 = vmatmul.mubr.f32.gmra.mxu0 %v814
      %v915 = vpop.f32.mrf.mxu0
      %v916 = vadd.f32 %v761, %v915
      %v917 = vpop.f32.mrf.mxu0
      %918 = vmatprep.mubr.f32.mxu0 0.0
      %919 = vmatmul.mubr.f32.gmra.mxu0 %v817
      %v920 = vpop.f32.mrf.mxu0
      %v921 = vadd.f32 %v761, %v920
      %v922 = vpop.f32.mrf.mxu0
      %923 = vdwg.mxu0
      %v924 = vmax.f32 %v886, 0.0
      %v925 = vmax.f32 %v891, 0.0
      %v926 = vmax.f32 %v896, 0.0
      %v927 = vmax.f32 %v901, 0.0
      %v928 = vmax.f32 %v906, 0.0
      %v929 = vmax.f32 %v911, 0.0
      %v930 = vmax.f32 %v916, 0.0
      %v931 = vmax.f32 %v921, 0.0
      %v932 = vpack.c.bf16 %v925, %v924
      %v933 = vpack.c.bf16 %v927, %v926
      %v934 = vpack.c.bf16 %v929, %v928
      %v935 = vpack.c.bf16 %v931, %v930
      %v940 = vunpack.c.l.b16 %v932
      %v941 = vunpack.c.h.b16 %v932
      %v942 = vunpack.c.l.b16 %v933
      %v943 = vunpack.c.h.b16 %v933
      %v944 = vunpack.c.l.b16 %v934
      %v945 = vunpack.c.h.b16 %v934
      %v946 = vunpack.c.l.b16 %v935
      %v947 = vunpack.c.h.b16 %v935
      %v948 = vpack.c.b16 %v940, %v940
      %v949 = vpack.c.b16 %v941, %v941
      %v950 = vpack.c.b16 %v942, %v942
      %v951 = vpack.c.b16 %v943, %v943
      %v952 = vpack.c.b16 %v944, %v944
      %v953 = vpack.c.b16 %v945, %v945
      %v954 = vpack.c.b16 %v946, %v946
      %v955 = vpack.c.b16 %v947, %v947
      %964 = vst.msk [vmem:[%s518] sm:$0xf] %vm743, %v948
      %965 = vst.msk [vmem:[%s518 + $0x4] sm:$0xf] %vm743, %v949
      %966 = vst.msk [vmem:[%s518 + $0x8] sm:$0xf] %vm743, %v950
      %967 = vst.msk [vmem:[%s518 + $0xc] sm:$0xf] %vm743, %v951
      %968 = vst.msk [vmem:[%s518 + $0x10] sm:$0xf] %vm743, %v952
      %969 = vst.msk [vmem:[%s518 + $0x14] sm:$0xf] %vm743, %v953
      %970 = vst.msk [vmem:[%s518 + $0x18] sm:$0xf] %vm743, %v954
      %971 = vst.msk [vmem:[%s518 + $0x1c] sm:$0xf] %vm743, %v955
      %v972 = vld [vmem:[%s499] sm:$0xff]
      %v973 = vld [vmem:[%s499 + $0x8] sm:$0xff]
      %v974 = vld [vmem:[%s7] sm:$0xff]
      %v975 = vld [vmem:[%s7 + $0x8] sm:$0xff]
      %v976 = vld [vmem:[%s8] sm:$0x1]
      %v978 = vlaneseq
      %v979 = vshrl.u32 %v978, 7
      %v980 = vsub.s32 0, %v979
      %v981 = vrot.slane %v976, %v980
      %983 = vxpose.xlu0.b32.start [1/16] %v972, 128
      %984 = vxpose.xlu0.b32.cont [2/16] %v973, 128
      %985 = vxpose.xlu0.b32.cont [3/16] 0.0, 128
      %986 = vxpose.xlu0.b32.cont [4/16] 0.0, 128
      %987 = vxpose.xlu0.b32.cont [5/16] 0.0, 128
      %988 = vxpose.xlu0.b32.cont [6/16] 0.0, 128
      %989 = vxpose.xlu0.b32.cont [7/16] 0.0, 128
      %990 = vxpose.xlu0.b32.cont [8/16] 0.0, 128
      %991 = vxpose.xlu0.b32.cont [9/16] 0.0, 128
      %992 = vxpose.xlu0.b32.cont [10/16] 0.0, 128
      %993 = vxpose.xlu0.b32.cont [11/16] 0.0, 128
      %994 = vxpose.xlu0.b32.cont [12/16] 0.0, 128
      %995 = vxpose.xlu0.b32.cont [13/16] 0.0, 128
      %996 = vxpose.xlu0.b32.cont [14/16] 0.0, 128
      %997 = vxpose.xlu0.b32.cont [15/16] 0.0, 128
      %998 = vxpose.xlu0.b32.end [16/16] 0.0, 128
      %v999 = vpop.trf.xlu0
      %v1000 = vpop.trf.xlu0
      %v1001 = vpop.trf.xlu0
      %v1002 = vpop.trf.xlu0
      %v1003 = vpop.trf.xlu0
      %v1004 = vpop.trf.xlu0
      %v1005 = vpop.trf.xlu0
      %v1006 = vpop.trf.xlu0
      %v1007 = vpop.trf.xlu0
      %v1008 = vpop.trf.xlu0
      %v1009 = vpop.trf.xlu0
      %v1010 = vpop.trf.xlu0
      %v1011 = vpop.trf.xlu0
      %v1012 = vpop.trf.xlu0
      %v1013 = vpop.trf.xlu0
      %v1014 = vpop.trf.xlu0
      %v1016 = vsel %vm573, %v999, 0
      %v1019 = vsel %vm573, %v1000, 0
      %v1022 = vsel %vm573, %v1001, 0
      %v1025 = vsel %vm573, %v1002, 0
      %v1028 = vsel %vm573, %v1003, 0
      %v1031 = vsel %vm573, %v1004, 0
      %v1034 = vsel %vm573, %v1005, 0
      %v1037 = vsel %vm573, %v1006, 0
      %1039 = vmatprep.subr.mxu0 0.0
      %1040 = vmatpush1.msra.mxu0 0.0
      %1041 = vmatprep.subr.mxu0 0.0
      %1042 = vmatpush1.msra.mxu0 0.0
      %1043 = vmatprep.subr.mxu0 0.0
      %1044 = vmatpush1.msra.mxu0 0.0
      %1045 = vmatprep.subr.mxu0 0.0
      %1046 = vmatpush1.msra.mxu0 0.0
      %1047 = vmatprep.subr.mxu0 0.0
      %1048 = vmatpush1.msra.mxu0 0.0
      %1049 = vmatprep.subr.mxu0 0.0
      %1050 = vmatpush1.msra.mxu0 0.0
      %1051 = vmatprep.subr.mxu0 0.0
      %1052 = vmatpush1.msra.mxu0 0.0
      %1053 = vmatprep.subr.mxu0 0.0
      %1054 = vmatpush1.msra.mxu0 0.0
      %1055 = vmatprep.subr.mxu0 0.0
      %1056 = vmatpush1.msra.mxu0 0.0
      %1057 = vmatprep.subr.mxu0 0.0
      %1058 = vmatpush1.msra.mxu0 0.0
      %1059 = vmatprep.subr.mxu0 0.0
      %1060 = vmatpush1.msra.mxu0 0.0
      %1061 = vmatprep.subr.mxu0 0.0
      %1062 = vmatpush1.msra.mxu0 0.0
      %1063 = vmatprep.subr.mxu0 0.0
      %1064 = vmatpush1.msra.mxu0 0.0
      %1065 = vmatprep.subr.mxu0 0.0
      %1066 = vmatpush1.msra.mxu0 0.0
      %1067 = vmatprep.subr.mxu0 0.0
      %1068 = vmatpush1.msra.mxu0 %v975
      %1069 = vmatprep.subr.mxu0 0.0
      %1070 = vmatpush1.msra.mxu0 %v974
      %1071 = vmatprep.subr.mxu0 0.0
      %1072 = vmatpush2.msra.mxu0 0.0
      %1073 = vmatprep.subr.mxu0 0.0
      %1074 = vmatpush2.msra.mxu0 0.0
      %1075 = vmatprep.subr.mxu0 0.0
      %1076 = vmatpush2.msra.mxu0 0.0
      %1077 = vmatprep.subr.mxu0 0.0
      %1078 = vmatpush2.msra.mxu0 0.0
      %1079 = vmatprep.subr.mxu0 0.0
      %1080 = vmatpush2.msra.mxu0 0.0
      %1081 = vmatprep.subr.mxu0 0.0
      %1082 = vmatpush2.msra.mxu0 0.0
      %1083 = vmatprep.subr.mxu0 0.0
      %1084 = vmatpush2.msra.mxu0 0.0
      %1085 = vmatprep.subr.mxu0 0.0
      %1086 = vmatpush2.msra.mxu0 0.0
      %1087 = vmatprep.subr.mxu0 0.0
      %1088 = vmatpush2.msra.mxu0 0.0
      %1089 = vmatprep.subr.mxu0 0.0
      %1090 = vmatpush2.msra.mxu0 0.0
      %1091 = vmatprep.subr.mxu0 0.0
      %1092 = vmatpush2.msra.mxu0 0.0
      %1093 = vmatprep.subr.mxu0 0.0
      %1094 = vmatpush2.msra.mxu0 0.0
      %1095 = vmatprep.subr.mxu0 0.0
      %1096 = vmatpush2.msra.mxu0 0.0
      %1097 = vmatprep.subr.mxu0 0.0
      %1098 = vmatpush2.msra.mxu0 0.0
      %1099 = vmatprep.subr.mxu0 0.0
      %1100 = vmatpush2.msra.mxu0 0.0
      %1101 = vmatprep.subr.mxu0 0.0
      %1102 = vmatpush2.msra.mxu0 0.0
      %1103 = vmatprep.mubr.f32.mxu0 0.0
      %1104 = vmatmul.mubr.f32.gmra.mxu0 %v1016
      %v1105 = vpop.f32.mrf.mxu0
      %v1106 = vadd.f32 %v981, %v1105
      %v1107 = vpop.f32.mrf.mxu0
      %1108 = vmatprep.mubr.f32.mxu0 0.0
      %1109 = vmatmul.mubr.f32.gmra.mxu0 %v1019
      %v1110 = vpop.f32.mrf.mxu0
      %v1111 = vadd.f32 %v981, %v1110
      %v1112 = vpop.f32.mrf.mxu0
      %1113 = vmatprep.mubr.f32.mxu0 0.0
      %1114 = vmatmul.mubr.f32.gmra.mxu0 %v1022
      %v1115 = vpop.f32.mrf.mxu0
      %v1116 = vadd.f32 %v981, %v1115
      %v1117 = vpop.f32.mrf.mxu0
      %1118 = vmatprep.mubr.f32.mxu0 0.0
      %1119 = vmatmul.mubr.f32.gmra.mxu0 %v1025
      %v1120 = vpop.f32.mrf.mxu0
      %v1121 = vadd.f32 %v981, %v1120
      %v1122 = vpop.f32.mrf.mxu0
      %1123 = vmatprep.mubr.f32.mxu0 0.0
      %1124 = vmatmul.mubr.f32.gmra.mxu0 %v1028
      %v1125 = vpop.f32.mrf.mxu0
      %v1126 = vadd.f32 %v981, %v1125
      %v1127 = vpop.f32.mrf.mxu0
      %1128 = vmatprep.mubr.f32.mxu0 0.0
      %1129 = vmatmul.mubr.f32.gmra.mxu0 %v1031
      %v1130 = vpop.f32.mrf.mxu0
      %v1131 = vadd.f32 %v981, %v1130
      %v1132 = vpop.f32.mrf.mxu0
      %1133 = vmatprep.mubr.f32.mxu0 0.0
      %1134 = vmatmul.mubr.f32.gmra.mxu0 %v1034
      %v1135 = vpop.f32.mrf.mxu0
      %v1136 = vadd.f32 %v981, %v1135
      %v1137 = vpop.f32.mrf.mxu0
      %1138 = vmatprep.mubr.f32.mxu0 0.0
      %1139 = vmatmul.mubr.f32.gmra.mxu0 %v1037
      %v1140 = vpop.f32.mrf.mxu0
      %v1141 = vadd.f32 %v981, %v1140
      %v1142 = vpop.f32.mrf.mxu0
      %1143 = vdwg.mxu0
      %v1144 = vmax.f32 %v1106, 0.0
      %v1145 = vmax.f32 %v1111, 0.0
      %v1146 = vmax.f32 %v1116, 0.0
      %v1147 = vmax.f32 %v1121, 0.0
      %v1148 = vmax.f32 %v1126, 0.0
      %v1149 = vmax.f32 %v1131, 0.0
      %v1150 = vmax.f32 %v1136, 0.0
      %v1151 = vmax.f32 %v1141, 0.0
      %v1152 = vpack.c.bf16 %v1145, %v1144
      %v1153 = vpack.c.bf16 %v1147, %v1146
      %v1154 = vpack.c.bf16 %v1149, %v1148
      %v1155 = vpack.c.bf16 %v1151, %v1150
      %v1160 = vunpack.c.l.b16 %v1152
      %v1161 = vunpack.c.h.b16 %v1152
      %v1162 = vunpack.c.l.b16 %v1153
      %v1163 = vunpack.c.h.b16 %v1153
      %v1164 = vunpack.c.l.b16 %v1154
      %v1165 = vunpack.c.h.b16 %v1154
      %v1166 = vunpack.c.l.b16 %v1155
      %v1167 = vunpack.c.h.b16 %v1155
      %v1168 = vpack.c.b16 %v1160, %v1160
      %v1169 = vpack.c.b16 %v1161, %v1161
      %v1170 = vpack.c.b16 %v1162, %v1162
      %v1171 = vpack.c.b16 %v1163, %v1163
      %v1172 = vpack.c.b16 %v1164, %v1164
      %v1173 = vpack.c.b16 %v1165, %v1165
      %v1174 = vpack.c.b16 %v1166, %v1166
      %v1175 = vpack.c.b16 %v1167, %v1167
      %vm1184 = vcmask 125952
      %1185 = vst.msk [vmem:[%s528] sm:$0xf] %vm1184, %v1168
      %1186 = vst.msk [vmem:[%s528 + $0x4] sm:$0xf] %vm1184, %v1169
      %1187 = vst.msk [vmem:[%s528 + $0x8] sm:$0xf] %vm1184, %v1170
      %1188 = vst.msk [vmem:[%s528 + $0xc] sm:$0xf] %vm1184, %v1171
      %1189 = vst.msk [vmem:[%s528 + $0x10] sm:$0xf] %vm1184, %v1172
      %1190 = vst.msk [vmem:[%s528 + $0x14] sm:$0xf] %vm1184, %v1173
      %1191 = vst.msk [vmem:[%s528 + $0x18] sm:$0xf] %vm1184, %v1174
      %1192 = vst.msk [vmem:[%s528 + $0x1c] sm:$0xf] %vm1184, %v1175
      %s1193 = smul.u32 8, %s28
      %p1194 = scmp.lt.s32.totalorder %s27, 1
      %s1195 = scalar_select %p1194, %s27, 1
      %p1196 = scmp.lt.s32.totalorder %s1193, 7
      %s1197 = scalar_select %p1196, %s1193, 7
      %s1198 = smul.addr %s1195, 8
      %s1199 = sadd.s32 %s1197, %s1198
      %s1200 = smul.addr %s1199, 4
      %s1201 = scalar_lea.vmem %s9, %s1200
      %s1202 = smul.u32 8, %s28
      %p1203 = scmp.lt.s32.totalorder %s27, 1
      %s1204 = scalar_select %p1203, %s27, 1
      %p1205 = scmp.lt.s32.totalorder %s1202, 7
      %s1206 = scalar_select %p1205, %s1202, 7
      %s1207 = smul.addr %s1204, 8
      %s1208 = sadd.s32 %s1206, %s1207
      %s1209 = smul.addr %s1208, 4
      %s1210 = scalar_lea.vmem %s10, %s1209
      %s1211 = smul.u32 8, %s28
      %p1212 = scmp.lt.s32.totalorder %s27, 1
      %s1213 = scalar_select %p1212, %s27, 1
      %p1214 = scmp.lt.s32.totalorder %s1211, 7
      %s1215 = scalar_select %p1214, %s1211, 7
      %s1216 = smul.addr %s1213, 8
      %s1217 = sadd.s32 %s1215, %s1216
      %s1218 = smul.addr %s1217, 4
      %s1219 = scalar_lea.vmem %s11, %s1218
      // Predicated region
      $region57: #{gfapm_forward.2} parent=55 // pred_check
        %p1220 = pneg %p265
      $region58: #{gfapm_forward.2} parent=55 // pred_check_branch
        %1222 = sbr.rel (%p1220) target = $region60
      $region59: #{gfapm_forward.2} parent=55 // pred_region
        %s1223 = smul.u32 8, %s28
      $region60: #{gfapm_forward.2} parent=55 // pred_fallthru
        _
      // Predicated region
      $region61: #{gfapm_forward.2} parent=55 // pred_check
        %p1224 = pneg %p293
      $region62: #{gfapm_forward.2} parent=55 // pred_check_branch
        %1226 = sbr.rel (%p1224) target = $region64
      $region63: #{gfapm_forward.2} parent=55 // pred_region
        %s1227 = smul.u32 8, %s28
      $region64: #{gfapm_forward.2} parent=55 // pred_fallthru
        _
      // Predicated region
      $region65: #{gfapm_forward.2} parent=55 // pred_check
        %p1228 = pneg %p321
      $region66: #{gfapm_forward.2} parent=55 // pred_check_branch
        %1230 = sbr.rel (%p1228) target = $region68
      $region67: #{gfapm_forward.2} parent=55 // pred_region
        %s1231 = smul.u32 8, %s28
      $region68: #{gfapm_forward.2} parent=55 // pred_fallthru
        _
    $region56: #{gfapm_forward.2} parent=5 // pred_fallthru
      _
    %p1232 = scmp.le.s32.totalorder 2, %s18
    // Predicated region
    $region69: #{gfapm_forward.2} parent=5 // pred_check
      %p1233 = pneg %p1232
    $region70: #{gfapm_forward.2} parent=5 // pred_check_branch
      %1235 = sbr.rel (%p1233) target = $region72
    $region71: #{gfapm_forward.2} parent=5 // pred_region
      %s1236 = ssub.s32 %s18, 2
      // Predicated region
      $region73: #{gfapm_forward.2} parent=71 // pred_check
        %p1237 = pneg %p271
      $region74: #{gfapm_forward.2} parent=71 // pred_check_branch
        %1239 = sbr.rel (%p1237) target = $region76
      $region75: #{gfapm_forward.2} parent=71 // pred_region
        %s1240 = smul.u32 8, %s30
        %p1241 = scmp.lt.s32.totalorder %s29, 1
        %s1242 = scalar_select %p1241, %s29, 1
        %p1243 = scmp.lt.s32.totalorder %s1240, 7
        %s1244 = scalar_select %p1243, %s1240, 7
        %s1245 = smul.addr %s1242, 8
        %s1246 = sadd.s32 %s1244, %s1245
        %s1247 = smul.addr %s1246, 4
        %s1248 = scalar_lea.vmem %s9, %s1247
      $region76: #{gfapm_forward.2} parent=71 // pred_fallthru
        _
      // Predicated region
      $region77: #{gfapm_forward.2} parent=71 // pred_check
        %p1249 = pneg %p299
      $region78: #{gfapm_forward.2} parent=71 // pred_check_branch
        %1251 = sbr.rel (%p1249) target = $region80
      $region79: #{gfapm_forward.2} parent=71 // pred_region
        %s1252 = smul.u32 8, %s30
        %p1253 = scmp.lt.s32.totalorder %s29, 1
        %s1254 = scalar_select %p1253, %s29, 1
        %p1255 = scmp.lt.s32.totalorder %s1252, 7
        %s1256 = scalar_select %p1255, %s1252, 7
        %s1257 = smul.addr %s1254, 8
        %s1258 = sadd.s32 %s1256, %s1257
        %s1259 = smul.addr %s1258, 4
        %s1260 = scalar_lea.vmem %s10, %s1259
      $region80: #{gfapm_forward.2} parent=71 // pred_fallthru
        _
      // Predicated region
      $region81: #{gfapm_forward.2} parent=71 // pred_check
        %p1261 = pneg %p327
      $region82: #{gfapm_forward.2} parent=71 // pred_check_branch
        %1263 = sbr.rel (%p1261) target = $region84
      $region83: #{gfapm_forward.2} parent=71 // pred_region
        %s1264 = smul.u32 8, %s30
        %p1265 = scmp.lt.s32.totalorder %s29, 1
        %s1266 = scalar_select %p1265, %s29, 1
        %p1267 = scmp.lt.s32.totalorder %s1264, 7
        %s1268 = scalar_select %p1267, %s1264, 7
        %s1269 = smul.addr %s1266, 8
        %s1270 = sadd.s32 %s1268, %s1269
        %s1271 = smul.addr %s1270, 4
        %s1272 = scalar_lea.vmem %s11, %s1271
      $region84: #{gfapm_forward.2} parent=71 // pred_fallthru
        _
    $region72: #{gfapm_forward.2} parent=5 // pred_fallthru
      _
  $region6: #{gfapm_forward.2} parent=0 // loop_footer
    %s22 = sadd.s32 1, %s18
  $region7: #{gfapm_forward.2} parent=0 // loop_footer_branch
    %17 = sbr.rel target = $region3
  $region8: #{gfapm_forward.2} parent=0 // loop_exit
    _

</llo_original>
